<compile_context>
chip_gen: v7x
topology: tpu7x:2x2x1
jax: 0.10.0
libtpu: 0.0.40
codegen_flags: <defaults>
</compile_context>

<pallas_src>
import functools

import jax
import jax.numpy as jnp
from jax import lax
from jax.experimental import pallas as pl
from jax.experimental.pallas import tpu as pltpu

# ----------------------- synthetic model config -----------------------
VOCAB = 512        # synthetic vocab (after resize_token_embeddings)
HIDDEN = 128       # hidden_size (128 -> lane-dense activations / outputs)
NUM_LAYERS = 4     # num_hidden_layers -> hidden_states has NUM_LAYERS + 1 entries
MAX_POS = 64       # max_position_embeddings
LN_EPS = 1e-12

# ALBERT tokenizer special ids (transformer side, i.e. after correction)
PAD_ID = 0         # '<pad>'
UNK_ID = 1         # '<unk>'
CLS_ID = 2         # '[CLS]'
SEP_ID = 3         # '[SEP]'


def _layer_norm(x, gamma, beta):
    mu = jnp.mean(x, axis=-1, keepdims=True)
    var = jnp.mean((x - mu) * (x - mu), axis=-1, keepdims=True)
    return (x - mu) * lax.rsqrt(var + LN_EPS) * gamma + beta


def _gather_rows(ids_sm, wte_hbm, tok_buf, sem):
    """DMA-gather this block's word-embedding rows from HBM into VMEM scratch."""
    tn = tok_buf.shape[0]
    base = pl.program_id(0) * tn
    for t in range(tn):                              # issue all row copies
        row = ids_sm[base + t]
        pltpu.make_async_copy(wte_hbm.at[pl.ds(row, 1)],
                              tok_buf.at[pl.ds(t, 1)],
                              sem.at[t]).start()
    for t in range(tn):                              # wait all
        pltpu.make_async_copy(wte_hbm.at[pl.ds(0, 1)],
                              tok_buf.at[pl.ds(t, 1)],
                              sem.at[t]).wait()
    return tok_buf[...]                              # [TN, H] f32


# =========================== kernels ===========================
def _lex_only_kernel(ids_sm, wte_hbm, ln_g_ref, ln_b_ref, h_out_ref, tok_buf, sem):
    # output_mode == "only": lex_seq = LayerNorm(word_embeddings(ids))
    tok = _gather_rows(ids_sm, wte_hbm, tok_buf, sem)
    h_out_ref[...] = _layer_norm(tok, ln_g_ref[...], ln_b_ref[...])


def _albert_fwd_kernel(ids_sm, wte_hbm, t1_ref, pos_tt0_ref, wtt_d_ref,
                       ln_g_ref, ln_b_ref, lw_ref, lb_ref, *rest,
                       output_mode, num_layers):
    if output_mode == "mix":
        mixw_ref, h_out_ref, tok_buf, sem = rest
    else:
        h_out_ref, tok_buf, sem = rest

    hdim = ln_g_ref.shape[-1]
    gamma, beta = ln_g_ref[...], ln_b_ref[...]

    tok = _gather_rows(ids_sm, wte_hbm, tok_buf, sem)          # [TN, H] f32

    if output_mode == "cat":
        # lex_seq reuses the gathered rows; write it out immediately so its
        # live range does not span the encoder loop.
        h_out_ref[:, hdim:] = _layer_norm(tok, gamma, beta)

    # embeddings: word + position + token_type  (wtt[0] is folded into pos_tt0,
    # t1 * (wtt[1]-wtt[0]) adds the segment-1 delta)
    x = tok + pos_tt0_ref[...] + t1_ref[...] * wtt_d_ref[...]
    h = _layer_norm(x, gamma, beta)                            # hidden_states[0]

    def layer(l, h):
        y = jnp.dot(h.astype(jnp.bfloat16), lw_ref[l],
                    preferred_element_type=jnp.float32) + lb_ref[l]
        return jax.nn.gelu(y)

    if output_mode == "mix":
        def body(l, carry):
            h, acc = carry
            h = layer(l, h)
            return h, acc + mixw_ref[l + 1] * h                # ScalarMix folded in
        _, acc = lax.fori_loop(0, num_layers, body, (h, mixw_ref[0] * h),
                               unroll=True)
        h_out_ref[...] = acc
    else:
        h = lax.fori_loop(0, num_layers, layer, h, unroll=True)
        if output_mode == "cat":
            h_out_ref[:, :hdim] = h
        else:                                                  # "top" / "none"
            h_out_ref[...] = h


# ================================ module wrapper ================================
class AlbertEmbedderPallas:
    """ALBERT embedder whose forward is a single gridded Pallas kernel."""

    def __init__(self, key, output_mode="mix"):
        assert output_mode in ("none", "top", "only", "cat", "mix")
        self.output_mode = output_mode
        self.num_layers = NUM_LAYERS
        self.max_layer = NUM_LAYERS           # transformers_max_layer < 0 -> num_layers
        self.max_pos = MAX_POS
        k = jax.random.split(key, 5)
        self.wte = jax.random.normal(k[0], (VOCAB, HIDDEN), jnp.float32) * 0.02
        self.wpe = jax.random.normal(k[1], (MAX_POS, HIDDEN), jnp.float32) * 0.02
        self.wtt = jax.random.normal(k[2], (2, HIDDEN), jnp.float32) * 0.02
        self.ln_gamma = jnp.ones((1, HIDDEN), jnp.float32)
        self.ln_beta = jnp.zeros((1, HIDDEN), jnp.float32)
        self.layer_w = (jax.random.normal(k[3], (NUM_LAYERS, HIDDEN, HIDDEN),
                                          jnp.float32)
                        * (HIDDEN ** -0.5)).astype(jnp.bfloat16)
        self.layer_b = jax.random.normal(
            k[4], (NUM_LAYERS, 1, HIDDEN), jnp.float32) * 0.01
        # ScalarMix parameters (max_layer + 1 scalars + gamma)
        self.mix_scalars = jnp.linspace(-0.5, 0.5,
                                        self.max_layer + 1).astype(jnp.float32)
        self.mix_gamma = jnp.float32(1.0)

    def get_output_dim(self):
        return 2 * HIDDEN if self.output_mode == "cat" else HIDDEN

    def forward(self, sent_ids, seqs_per_block=1):
        B, S = sent_ids.shape
        assert S <= self.max_pos, "input length exceeds position embedding capacity"
        assert B % seqs_per_block == 0
        N = B * S
        tn = seqs_per_block * S               # rows per block (whole sequences)
        grid = (N // tn,)
        H, L = HIDDEN, self.num_layers
        out_dim = self.get_output_dim()

        # ---------------- wrapper glue (tiny int/elementwise ops, hoisted) ----------
        ids = sent_ids.astype(jnp.int32)
        input_mask = (ids != 0).astype(jnp.int32)                       # [B, S]
        # correct_sent_indexing: 0 -> _pad_id, 1 -> _unk_id, >= 2 -> id - 2
        ids_c = jnp.where(ids > 1, ids - 2,
                          jnp.where(ids == 1, UNK_ID, PAD_ID))
        # get_seg_ids: #[SEP] strictly before each position, zeroed at padding
        sep = (ids_c == SEP_ID).astype(jnp.int32)
        seg = (jnp.cumsum(sep, axis=-1) - sep) * input_mask
        t1 = (seg >= 1).astype(jnp.float32).reshape(N, 1)               # [N, 1]
        ids_flat = ids_c.reshape(N)                                     # scalar prefetch

        # Per-block position pattern is identical (blocks hold whole sequences):
        # precompute pos + token_type_0 once; token_type_1 delta added via t1.
        pos_tt0 = jnp.tile(self.wpe[:S], (seqs_per_block, 1)) + self.wtt[0:1]
        wtt_d = self.wtt[1:2] - self.wtt[0:1]                           # [1, H]

        res2 = lambda shape: pl.BlockSpec(shape, lambda i, ids_ref: (0, 0))

        if self.output_mode == "only":
            kernel = _lex_only_kernel
            in_specs = [pl.BlockSpec(memory_space=pl.ANY),              # wte (HBM)
                        res2((1, H)), res2((1, H))]                     # ln gamma/beta
            args = (ids_flat, self.wte, self.ln_gamma, self.ln_beta)
        else:
            kernel = functools.partial(_albert_fwd_kernel,
                                       output_mode=self.output_mode,
                                       num_layers=L)
            in_specs = [
                pl.BlockSpec(memory_space=pl.ANY),                      # wte (HBM)
                pl.BlockSpec((tn, 1), lambda i, ids_ref: (i, 0)),       # t1 column
                res2((tn, H)),                                          # pos_tt0 resident
                res2((1, H)), res2((1, H)), res2((1, H)),               # wtt_d, ln_g, ln_b
                pl.BlockSpec((L, H, H), lambda i, ids_ref: (0, 0, 0)),  # layer weights
                pl.BlockSpec((L, 1, H), lambda i, ids_ref: (0, 0, 0)),  # layer biases
            ]
            args = (ids_flat, self.wte, t1, pos_tt0, wtt_d,
                    self.ln_gamma, self.ln_beta, self.layer_w, self.layer_b)
            if self.output_mode == "mix":
                mixw = (jax.nn.softmax(self.mix_scalars)
                        * self.mix_gamma).astype(jnp.float32)           # [L+1]
                in_specs.append(pl.BlockSpec(memory_space=pltpu.MemorySpace.SMEM))
                args = args + (mixw,)

        grid_spec = pltpu.PrefetchScalarGridSpec(
            num_scalar_prefetch=1,                 # corrected ids -> SMEM row gather
            grid=grid,
            in_specs=in_specs,
            out_specs=pl.BlockSpec((tn, out_dim), lambda i, ids_ref: (i, 0)),
            scratch_shapes=[pltpu.VMEM((tn, H), jnp.float32),           # gathered rows
                            pltpu.SemaphoreType.DMA((tn,))],
        )

        h_flat = pl.pallas_call(
            kernel,
            grid_spec=grid_spec,
            out_shape=jax.ShapeDtypeStruct((N, out_dim), jnp.float32),
            compiler_params=pltpu.CompilerParams(
                dimension_semantics=("parallel",)),
        )(*args)

        return h_flat.reshape(B, S, out_dim), input_mask


# ==================================== main ====================================
if __name__ == "__main__":
    key = jax.random.PRNGKey(0)
    k_param, k_ids = jax.random.split(key)

    B, S = 2, 8
    # AllenNLP-style ids: 0 = @@PADDING@@, 1 = @@UNKNOWN@@, >= 2 valid tokens
    # (a valid AllenNLP id t maps to transformer id t - 2; keep t - 2 < VOCAB).
    ids = jax.random.randint(k_ids, (B, S), 6, VOCAB, dtype=jnp.int32)
    ids = ids.at[:, 0].set(CLS_ID + 2)     # [CLS]
    ids = ids.at[0, 4].set(SEP_ID + 2)     # [SEP] separating a sentence pair
    ids = ids.at[0, 7].set(SEP_ID + 2)     # trailing [SEP]
    ids = ids.at[1, 5].set(SEP_ID + 2)
    ids = ids.at[1, 3].set(1)              # @@UNKNOWN@@
    ids = ids.at[1, 7].set(0)              # @@PADDING@@

    outputs = {}
    mask = None
    for mode in ("mix", "cat", "top", "only"):
        module = AlbertEmbedderPallas(k_param, output_mode=mode)
        h, mask = module.forward(ids)
        h = jax.block_until_ready(h)
        mask = jax.block_until_ready(mask)
        assert h.shape == (B, S, module.get_output_dim()), (mode, h.shape)
        assert mask.shape == (B, S)
        assert bool(jnp.all(jnp.isfinite(h))), mode
        outputs[mode] = h

    # input_mask reflects AllenNLP padding (mask is mode-independent)
    assert int(mask[1, 7]) == 0 and int(mask[0, 0]) == 1
    # "cat" = concat(top hidden layer, LayerNorm(word embedding))
    assert outputs["cat"].shape[-1] == 2 * HIDDEN

    print("KERNEL_OK")
</pallas_src>

<mosaic_0001>
module attributes {stable_mosaic.version = 11 : i64} {
  func.func @_albert_fwd_kernel(%arg0: i32, %arg1: memref<16xi32, #tpu.memory_space<smem>>, %arg2: memref<512x128xf32, #tpu.memory_space<any>>, %arg3: memref<8x1xf32, #tpu.memory_space<vmem>>, %arg4: memref<8x128xf32, #tpu.memory_space<vmem>>, %arg5: memref<1x128xf32, #tpu.memory_space<vmem>>, %arg6: memref<1x128xf32, #tpu.memory_space<vmem>>, %arg7: memref<1x128xf32, #tpu.memory_space<vmem>>, %arg8: memref<4x128x128xbf16, #tpu.memory_space<vmem>>, %arg9: memref<4x1x128xf32, #tpu.memory_space<vmem>>, %arg10: memref<5xf32, #tpu.memory_space<smem>>, %arg11: memref<8x128xf32, #tpu.memory_space<vmem>>, %arg12: memref<8x128xf32, #tpu.memory_space<vmem>>, %arg13: memref<8x!tpu.dma_semaphore, #tpu.memory_space<semaphore_mem>>) attributes {dimension_semantics = [#tpu.dimension_semantics<parallel>], iteration_bounds = array<i64: 2>, scalar_prefetch = 1 : i64, scratch_operands = 2 : i64, tpu.core_type = #tpu.core_type<tc>, window_params = [{}, {transform_indices = @transform_1, window_bounds = array<i64: 8, 1>}, {pipeline_mode = #tpu.pipeline_mode<synchronous>, transform_indices = @transform_2, window_bounds = array<i64: 8, 128>}, {pipeline_mode = #tpu.pipeline_mode<synchronous>, transform_indices = @transform_3, window_bounds = array<i64: 1, 128>}, {pipeline_mode = #tpu.pipeline_mode<synchronous>, transform_indices = @transform_4, window_bounds = array<i64: 1, 128>}, {pipeline_mode = #tpu.pipeline_mode<synchronous>, transform_indices = @transform_5, window_bounds = array<i64: 1, 128>}, {pipeline_mode = #tpu.pipeline_mode<synchronous>, transform_indices = @transform_6, window_bounds = array<i64: 4, 128, 128>}, {pipeline_mode = #tpu.pipeline_mode<synchronous>, transform_indices = @transform_7, window_bounds = array<i64: 4, 1, 128>}, {transform_indices = @transform_8, window_bounds = array<i64: 5>}, {transform_indices = @transform_9, window_bounds = array<i64: 8, 128>}]} {
    %c0 = arith.constant 0 : index
    %c0_0 = arith.constant 0 : index
    %0 = vector.load %arg6[%c0, %c0_0] : memref<1x128xf32, #tpu.memory_space<vmem>>, vector<1x128xf32>
    %c0_1 = arith.constant 0 : index
    %c0_2 = arith.constant 0 : index
    %1 = vector.load %arg7[%c0_1, %c0_2] : memref<1x128xf32, #tpu.memory_space<vmem>>, vector<1x128xf32>
    %c8_i32 = arith.constant 8 : i32
    %2 = arith.muli %arg0, %c8_i32 : i32
    %c0_i32 = arith.constant 0 : i32
    %3 = arith.addi %2, %c0_i32 : i32
    %4 = arith.index_cast %3 : i32 to index
    %5 = memref.load %arg1[%4] : memref<16xi32, #tpu.memory_space<smem>>
    %c0_i32_3 = arith.constant 0 : i32
    %c0_i32_4 = arith.constant 0 : i32
    %6 = tpu.memref_slice %arg2[%5, %c0_i32_4] : memref<512x128xf32, #tpu.memory_space<any>> -> memref<1x128xf32, #tpu.memory_space<any>>
    %c0_i32_5 = arith.constant 0 : i32
    %c0_i32_6 = arith.constant 0 : i32
    %7 = tpu.memref_slice %arg12[%c0_i32_5, %c0_i32_6] : memref<8x128xf32, #tpu.memory_space<vmem>> -> memref<1x128xf32, #tpu.memory_space<vmem>>
    %8 = tpu.memref_slice %arg13[%c0_i32_3] : memref<8x!tpu.dma_semaphore, #tpu.memory_space<semaphore_mem>> -> memref<1x!tpu.dma_semaphore, #tpu.memory_space<semaphore_mem>>
    %9 = tpu.memref_squeeze %8 : memref<1x!tpu.dma_semaphore, #tpu.memory_space<semaphore_mem>> -> memref<!tpu.dma_semaphore, #tpu.memory_space<semaphore_mem>>
    tpu.enqueue_dma source(%6 : memref<1x128xf32, #tpu.memory_space<any>>) target(%7 : memref<1x128xf32, #tpu.memory_space<vmem>>) target_semaphore(%9 : memref<!tpu.dma_semaphore, #tpu.memory_space<semaphore_mem>>)
    %c1_i32 = arith.constant 1 : i32
    %10 = arith.addi %2, %c1_i32 : i32
    %11 = arith.index_cast %10 : i32 to index
    %12 = memref.load %arg1[%11] : memref<16xi32, #tpu.memory_space<smem>>
    %c1_i32_7 = arith.constant 1 : i32
    %c0_i32_8 = arith.constant 0 : i32
    %13 = tpu.memref_slice %arg2[%12, %c0_i32_8] : memref<512x128xf32, #tpu.memory_space<any>> -> memref<1x128xf32, #tpu.memory_space<any>>
    %c1_i32_9 = arith.constant 1 : i32
    %c0_i32_10 = arith.constant 0 : i32
    %14 = tpu.memref_slice %arg12[%c1_i32_9, %c0_i32_10] : memref<8x128xf32, #tpu.memory_space<vmem>> -> memref<1x128xf32, #tpu.memory_space<vmem>>
    %15 = tpu.memref_slice %arg13[%c1_i32_7] : memref<8x!tpu.dma_semaphore, #tpu.memory_space<semaphore_mem>> -> memref<1x!tpu.dma_semaphore, #tpu.memory_space<semaphore_mem>>
    %16 = tpu.memref_squeeze %15 : memref<1x!tpu.dma_semaphore, #tpu.memory_space<semaphore_mem>> -> memref<!tpu.dma_semaphore, #tpu.memory_space<semaphore_mem>>
    tpu.enqueue_dma source(%13 : memref<1x128xf32, #tpu.memory_space<any>>) target(%14 : memref<1x128xf32, #tpu.memory_space<vmem>>) target_semaphore(%16 : memref<!tpu.dma_semaphore, #tpu.memory_space<semaphore_mem>>)
    %c2_i32 = arith.constant 2 : i32
    %17 = arith.addi %2, %c2_i32 : i32
    %18 = arith.index_cast %17 : i32 to index
    %19 = memref.load %arg1[%18] : memref<16xi32, #tpu.memory_space<smem>>
    %c2_i32_11 = arith.constant 2 : i32
    %c0_i32_12 = arith.constant 0 : i32
    %20 = tpu.memref_slice %arg2[%19, %c0_i32_12] : memref<512x128xf32, #tpu.memory_space<any>> -> memref<1x128xf32, #tpu.memory_space<any>>
    %c2_i32_13 = arith.constant 2 : i32
    %c0_i32_14 = arith.constant 0 : i32
    %21 = tpu.memref_slice %arg12[%c2_i32_13, %c0_i32_14] : memref<8x128xf32, #tpu.memory_space<vmem>> -> memref<1x128xf32, #tpu.memory_space<vmem>>
    %22 = tpu.memref_slice %arg13[%c2_i32_11] : memref<8x!tpu.dma_semaphore, #tpu.memory_space<semaphore_mem>> -> memref<1x!tpu.dma_semaphore, #tpu.memory_space<semaphore_mem>>
    %23 = tpu.memref_squeeze %22 : memref<1x!tpu.dma_semaphore, #tpu.memory_space<semaphore_mem>> -> memref<!tpu.dma_semaphore, #tpu.memory_space<semaphore_mem>>
    tpu.enqueue_dma source(%20 : memref<1x128xf32, #tpu.memory_space<any>>) target(%21 : memref<1x128xf32, #tpu.memory_space<vmem>>) target_semaphore(%23 : memref<!tpu.dma_semaphore, #tpu.memory_space<semaphore_mem>>)
    %c3_i32 = arith.constant 3 : i32
    %24 = arith.addi %2, %c3_i32 : i32
    %25 = arith.index_cast %24 : i32 to index
    %26 = memref.load %arg1[%25] : memref<16xi32, #tpu.memory_space<smem>>
    %c3_i32_15 = arith.constant 3 : i32
    %c0_i32_16 = arith.constant 0 : i32
    %27 = tpu.memref_slice %arg2[%26, %c0_i32_16] : memref<512x128xf32, #tpu.memory_space<any>> -> memref<1x128xf32, #tpu.memory_space<any>>
    %c3_i32_17 = arith.constant 3 : i32
    %c0_i32_18 = arith.constant 0 : i32
    %28 = tpu.memref_slice %arg12[%c3_i32_17, %c0_i32_18] : memref<8x128xf32, #tpu.memory_space<vmem>> -> memref<1x128xf32, #tpu.memory_space<vmem>>
    %29 = tpu.memref_slice %arg13[%c3_i32_15] : memref<8x!tpu.dma_semaphore, #tpu.memory_space<semaphore_mem>> -> memref<1x!tpu.dma_semaphore, #tpu.memory_space<semaphore_mem>>
    %30 = tpu.memref_squeeze %29 : memref<1x!tpu.dma_semaphore, #tpu.memory_space<semaphore_mem>> -> memref<!tpu.dma_semaphore, #tpu.memory_space<semaphore_mem>>
    tpu.enqueue_dma source(%27 : memref<1x128xf32, #tpu.memory_space<any>>) target(%28 : memref<1x128xf32, #tpu.memory_space<vmem>>) target_semaphore(%30 : memref<!tpu.dma_semaphore, #tpu.memory_space<semaphore_mem>>)
    %c4_i32 = arith.constant 4 : i32
    %31 = arith.addi %2, %c4_i32 : i32
    %32 = arith.index_cast %31 : i32 to index
    %33 = memref.load %arg1[%32] : memref<16xi32, #tpu.memory_space<smem>>
    %c4_i32_19 = arith.constant 4 : i32
    %c0_i32_20 = arith.constant 0 : i32
    %34 = tpu.memref_slice %arg2[%33, %c0_i32_20] : memref<512x128xf32, #tpu.memory_space<any>> -> memref<1x128xf32, #tpu.memory_space<any>>
    %c4_i32_21 = arith.constant 4 : i32
    %c0_i32_22 = arith.constant 0 : i32
    %35 = tpu.memref_slice %arg12[%c4_i32_21, %c0_i32_22] : memref<8x128xf32, #tpu.memory_space<vmem>> -> memref<1x128xf32, #tpu.memory_space<vmem>>
    %36 = tpu.memref_slice %arg13[%c4_i32_19] : memref<8x!tpu.dma_semaphore, #tpu.memory_space<semaphore_mem>> -> memref<1x!tpu.dma_semaphore, #tpu.memory_space<semaphore_mem>>
    %37 = tpu.memref_squeeze %36 : memref<1x!tpu.dma_semaphore, #tpu.memory_space<semaphore_mem>> -> memref<!tpu.dma_semaphore, #tpu.memory_space<semaphore_mem>>
    tpu.enqueue_dma source(%34 : memref<1x128xf32, #tpu.memory_space<any>>) target(%35 : memref<1x128xf32, #tpu.memory_space<vmem>>) target_semaphore(%37 : memref<!tpu.dma_semaphore, #tpu.memory_space<semaphore_mem>>)
    %c5_i32 = arith.constant 5 : i32
    %38 = arith.addi %2, %c5_i32 : i32
    %39 = arith.index_cast %38 : i32 to index
    %40 = memref.load %arg1[%39] : memref<16xi32, #tpu.memory_space<smem>>
    %c5_i32_23 = arith.constant 5 : i32
    %c0_i32_24 = arith.constant 0 : i32
    %41 = tpu.memref_slice %arg2[%40, %c0_i32_24] : memref<512x128xf32, #tpu.memory_space<any>> -> memref<1x128xf32, #tpu.memory_space<any>>
    %c5_i32_25 = arith.constant 5 : i32
    %c0_i32_26 = arith.constant 0 : i32
    %42 = tpu.memref_slice %arg12[%c5_i32_25, %c0_i32_26] : memref<8x128xf32, #tpu.memory_space<vmem>> -> memref<1x128xf32, #tpu.memory_space<vmem>>
    %43 = tpu.memref_slice %arg13[%c5_i32_23] : memref<8x!tpu.dma_semaphore, #tpu.memory_space<semaphore_mem>> -> memref<1x!tpu.dma_semaphore, #tpu.memory_space<semaphore_mem>>
    %44 = tpu.memref_squeeze %43 : memref<1x!tpu.dma_semaphore, #tpu.memory_space<semaphore_mem>> -> memref<!tpu.dma_semaphore, #tpu.memory_space<semaphore_mem>>
    tpu.enqueue_dma source(%41 : memref<1x128xf32, #tpu.memory_space<any>>) target(%42 : memref<1x128xf32, #tpu.memory_space<vmem>>) target_semaphore(%44 : memref<!tpu.dma_semaphore, #tpu.memory_space<semaphore_mem>>)
    %c6_i32 = arith.constant 6 : i32
    %45 = arith.addi %2, %c6_i32 : i32
    %46 = arith.index_cast %45 : i32 to index
    %47 = memref.load %arg1[%46] : memref<16xi32, #tpu.memory_space<smem>>
    %c6_i32_27 = arith.constant 6 : i32
    %c0_i32_28 = arith.constant 0 : i32
    %48 = tpu.memref_slice %arg2[%47, %c0_i32_28] : memref<512x128xf32, #tpu.memory_space<any>> -> memref<1x128xf32, #tpu.memory_space<any>>
    %c6_i32_29 = arith.constant 6 : i32
    %c0_i32_30 = arith.constant 0 : i32
    %49 = tpu.memref_slice %arg12[%c6_i32_29, %c0_i32_30] : memref<8x128xf32, #tpu.memory_space<vmem>> -> memref<1x128xf32, #tpu.memory_space<vmem>>
    %50 = tpu.memref_slice %arg13[%c6_i32_27] : memref<8x!tpu.dma_semaphore, #tpu.memory_space<semaphore_mem>> -> memref<1x!tpu.dma_semaphore, #tpu.memory_space<semaphore_mem>>
    %51 = tpu.memref_squeeze %50 : memref<1x!tpu.dma_semaphore, #tpu.memory_space<semaphore_mem>> -> memref<!tpu.dma_semaphore, #tpu.memory_space<semaphore_mem>>
    tpu.enqueue_dma source(%48 : memref<1x128xf32, #tpu.memory_space<any>>) target(%49 : memref<1x128xf32, #tpu.memory_space<vmem>>) target_semaphore(%51 : memref<!tpu.dma_semaphore, #tpu.memory_space<semaphore_mem>>)
    %c7_i32 = arith.constant 7 : i32
    %52 = arith.addi %2, %c7_i32 : i32
    %53 = arith.index_cast %52 : i32 to index
    %54 = memref.load %arg1[%53] : memref<16xi32, #tpu.memory_space<smem>>
    %c7_i32_31 = arith.constant 7 : i32
    %c0_i32_32 = arith.constant 0 : i32
    %55 = tpu.memref_slice %arg2[%54, %c0_i32_32] : memref<512x128xf32, #tpu.memory_space<any>> -> memref<1x128xf32, #tpu.memory_space<any>>
    %c7_i32_33 = arith.constant 7 : i32
    %c0_i32_34 = arith.constant 0 : i32
    %56 = tpu.memref_slice %arg12[%c7_i32_33, %c0_i32_34] : memref<8x128xf32, #tpu.memory_space<vmem>> -> memref<1x128xf32, #tpu.memory_space<vmem>>
    %57 = tpu.memref_slice %arg13[%c7_i32_31] : memref<8x!tpu.dma_semaphore, #tpu.memory_space<semaphore_mem>> -> memref<1x!tpu.dma_semaphore, #tpu.memory_space<semaphore_mem>>
    %58 = tpu.memref_squeeze %57 : memref<1x!tpu.dma_semaphore, #tpu.memory_space<semaphore_mem>> -> memref<!tpu.dma_semaphore, #tpu.memory_space<semaphore_mem>>
    tpu.enqueue_dma source(%55 : memref<1x128xf32, #tpu.memory_space<any>>) target(%56 : memref<1x128xf32, #tpu.memory_space<vmem>>) target_semaphore(%58 : memref<!tpu.dma_semaphore, #tpu.memory_space<semaphore_mem>>)
    %c0_i32_35 = arith.constant 0 : i32
    %c0_i32_36 = arith.constant 0 : i32
    %c0_i32_37 = arith.constant 0 : i32
    %59 = tpu.memref_slice %arg2[%c0_i32_36, %c0_i32_37] : memref<512x128xf32, #tpu.memory_space<any>> -> memref<1x128xf32, #tpu.memory_space<any>>
    %c0_i32_38 = arith.constant 0 : i32
    %c0_i32_39 = arith.constant 0 : i32
    %60 = tpu.memref_slice %arg12[%c0_i32_38, %c0_i32_39] : memref<8x128xf32, #tpu.memory_space<vmem>> -> memref<1x128xf32, #tpu.memory_space<vmem>>
    %61 = tpu.memref_slice %arg13[%c0_i32_35] : memref<8x!tpu.dma_semaphore, #tpu.memory_space<semaphore_mem>> -> memref<1x!tpu.dma_semaphore, #tpu.memory_space<semaphore_mem>>
    %62 = tpu.memref_squeeze %61 : memref<1x!tpu.dma_semaphore, #tpu.memory_space<semaphore_mem>> -> memref<!tpu.dma_semaphore, #tpu.memory_space<semaphore_mem>>
    tpu.wait_dma2 semaphore(%62 : memref<!tpu.dma_semaphore, #tpu.memory_space<semaphore_mem>>) src(%59 : memref<1x128xf32, #tpu.memory_space<any>>) dst(%60 : memref<1x128xf32, #tpu.memory_space<vmem>>)
    %c1_i32_40 = arith.constant 1 : i32
    %c0_i32_41 = arith.constant 0 : i32
    %c0_i32_42 = arith.constant 0 : i32
    %63 = tpu.memref_slice %arg2[%c0_i32_41, %c0_i32_42] : memref<512x128xf32, #tpu.memory_space<any>> -> memref<1x128xf32, #tpu.memory_space<any>>
    %c1_i32_43 = arith.constant 1 : i32
    %c0_i32_44 = arith.constant 0 : i32
    %64 = tpu.memref_slice %arg12[%c1_i32_43, %c0_i32_44] : memref<8x128xf32, #tpu.memory_space<vmem>> -> memref<1x128xf32, #tpu.memory_space<vmem>>
    %65 = tpu.memref_slice %arg13[%c1_i32_40] : memref<8x!tpu.dma_semaphore, #tpu.memory_space<semaphore_mem>> -> memref<1x!tpu.dma_semaphore, #tpu.memory_space<semaphore_mem>>
    %66 = tpu.memref_squeeze %65 : memref<1x!tpu.dma_semaphore, #tpu.memory_space<semaphore_mem>> -> memref<!tpu.dma_semaphore, #tpu.memory_space<semaphore_mem>>
    tpu.wait_dma2 semaphore(%66 : memref<!tpu.dma_semaphore, #tpu.memory_space<semaphore_mem>>) src(%63 : memref<1x128xf32, #tpu.memory_space<any>>) dst(%64 : memref<1x128xf32, #tpu.memory_space<vmem>>)
    %c2_i32_45 = arith.constant 2 : i32
    %c0_i32_46 = arith.constant 0 : i32
    %c0_i32_47 = arith.constant 0 : i32
    %67 = tpu.memref_slice %arg2[%c0_i32_46, %c0_i32_47] : memref<512x128xf32, #tpu.memory_space<any>> -> memref<1x128xf32, #tpu.memory_space<any>>
    %c2_i32_48 = arith.constant 2 : i32
    %c0_i32_49 = arith.constant 0 : i32
    %68 = tpu.memref_slice %arg12[%c2_i32_48, %c0_i32_49] : memref<8x128xf32, #tpu.memory_space<vmem>> -> memref<1x128xf32, #tpu.memory_space<vmem>>
    %69 = tpu.memref_slice %arg13[%c2_i32_45] : memref<8x!tpu.dma_semaphore, #tpu.memory_space<semaphore_mem>> -> memref<1x!tpu.dma_semaphore, #tpu.memory_space<semaphore_mem>>
    %70 = tpu.memref_squeeze %69 : memref<1x!tpu.dma_semaphore, #tpu.memory_space<semaphore_mem>> -> memref<!tpu.dma_semaphore, #tpu.memory_space<semaphore_mem>>
    tpu.wait_dma2 semaphore(%70 : memref<!tpu.dma_semaphore, #tpu.memory_space<semaphore_mem>>) src(%67 : memref<1x128xf32, #tpu.memory_space<any>>) dst(%68 : memref<1x128xf32, #tpu.memory_space<vmem>>)
    %c3_i32_50 = arith.constant 3 : i32
    %c0_i32_51 = arith.constant 0 : i32
    %c0_i32_52 = arith.constant 0 : i32
    %71 = tpu.memref_slice %arg2[%c0_i32_51, %c0_i32_52] : memref<512x128xf32, #tpu.memory_space<any>> -> memref<1x128xf32, #tpu.memory_space<any>>
    %c3_i32_53 = arith.constant 3 : i32
    %c0_i32_54 = arith.constant 0 : i32
    %72 = tpu.memref_slice %arg12[%c3_i32_53, %c0_i32_54] : memref<8x128xf32, #tpu.memory_space<vmem>> -> memref<1x128xf32, #tpu.memory_space<vmem>>
    %73 = tpu.memref_slice %arg13[%c3_i32_50] : memref<8x!tpu.dma_semaphore, #tpu.memory_space<semaphore_mem>> -> memref<1x!tpu.dma_semaphore, #tpu.memory_space<semaphore_mem>>
    %74 = tpu.memref_squeeze %73 : memref<1x!tpu.dma_semaphore, #tpu.memory_space<semaphore_mem>> -> memref<!tpu.dma_semaphore, #tpu.memory_space<semaphore_mem>>
    tpu.wait_dma2 semaphore(%74 : memref<!tpu.dma_semaphore, #tpu.memory_space<semaphore_mem>>) src(%71 : memref<1x128xf32, #tpu.memory_space<any>>) dst(%72 : memref<1x128xf32, #tpu.memory_space<vmem>>)
    %c4_i32_55 = arith.constant 4 : i32
    %c0_i32_56 = arith.constant 0 : i32
    %c0_i32_57 = arith.constant 0 : i32
    %75 = tpu.memref_slice %arg2[%c0_i32_56, %c0_i32_57] : memref<512x128xf32, #tpu.memory_space<any>> -> memref<1x128xf32, #tpu.memory_space<any>>
    %c4_i32_58 = arith.constant 4 : i32
    %c0_i32_59 = arith.constant 0 : i32
    %76 = tpu.memref_slice %arg12[%c4_i32_58, %c0_i32_59] : memref<8x128xf32, #tpu.memory_space<vmem>> -> memref<1x128xf32, #tpu.memory_space<vmem>>
    %77 = tpu.memref_slice %arg13[%c4_i32_55] : memref<8x!tpu.dma_semaphore, #tpu.memory_space<semaphore_mem>> -> memref<1x!tpu.dma_semaphore, #tpu.memory_space<semaphore_mem>>
    %78 = tpu.memref_squeeze %77 : memref<1x!tpu.dma_semaphore, #tpu.memory_space<semaphore_mem>> -> memref<!tpu.dma_semaphore, #tpu.memory_space<semaphore_mem>>
    tpu.wait_dma2 semaphore(%78 : memref<!tpu.dma_semaphore, #tpu.memory_space<semaphore_mem>>) src(%75 : memref<1x128xf32, #tpu.memory_space<any>>) dst(%76 : memref<1x128xf32, #tpu.memory_space<vmem>>)
    %c5_i32_60 = arith.constant 5 : i32
    %c0_i32_61 = arith.constant 0 : i32
    %c0_i32_62 = arith.constant 0 : i32
    %79 = tpu.memref_slice %arg2[%c0_i32_61, %c0_i32_62] : memref<512x128xf32, #tpu.memory_space<any>> -> memref<1x128xf32, #tpu.memory_space<any>>
    %c5_i32_63 = arith.constant 5 : i32
    %c0_i32_64 = arith.constant 0 : i32
    %80 = tpu.memref_slice %arg12[%c5_i32_63, %c0_i32_64] : memref<8x128xf32, #tpu.memory_space<vmem>> -> memref<1x128xf32, #tpu.memory_space<vmem>>
    %81 = tpu.memref_slice %arg13[%c5_i32_60] : memref<8x!tpu.dma_semaphore, #tpu.memory_space<semaphore_mem>> -> memref<1x!tpu.dma_semaphore, #tpu.memory_space<semaphore_mem>>
    %82 = tpu.memref_squeeze %81 : memref<1x!tpu.dma_semaphore, #tpu.memory_space<semaphore_mem>> -> memref<!tpu.dma_semaphore, #tpu.memory_space<semaphore_mem>>
    tpu.wait_dma2 semaphore(%82 : memref<!tpu.dma_semaphore, #tpu.memory_space<semaphore_mem>>) src(%79 : memref<1x128xf32, #tpu.memory_space<any>>) dst(%80 : memref<1x128xf32, #tpu.memory_space<vmem>>)
    %c6_i32_65 = arith.constant 6 : i32
    %c0_i32_66 = arith.constant 0 : i32
    %c0_i32_67 = arith.constant 0 : i32
    %83 = tpu.memref_slice %arg2[%c0_i32_66, %c0_i32_67] : memref<512x128xf32, #tpu.memory_space<any>> -> memref<1x128xf32, #tpu.memory_space<any>>
    %c6_i32_68 = arith.constant 6 : i32
    %c0_i32_69 = arith.constant 0 : i32
    %84 = tpu.memref_slice %arg12[%c6_i32_68, %c0_i32_69] : memref<8x128xf32, #tpu.memory_space<vmem>> -> memref<1x128xf32, #tpu.memory_space<vmem>>
    %85 = tpu.memref_slice %arg13[%c6_i32_65] : memref<8x!tpu.dma_semaphore, #tpu.memory_space<semaphore_mem>> -> memref<1x!tpu.dma_semaphore, #tpu.memory_space<semaphore_mem>>
    %86 = tpu.memref_squeeze %85 : memref<1x!tpu.dma_semaphore, #tpu.memory_space<semaphore_mem>> -> memref<!tpu.dma_semaphore, #tpu.memory_space<semaphore_mem>>
    tpu.wait_dma2 semaphore(%86 : memref<!tpu.dma_semaphore, #tpu.memory_space<semaphore_mem>>) src(%83 : memref<1x128xf32, #tpu.memory_space<any>>) dst(%84 : memref<1x128xf32, #tpu.memory_space<vmem>>)
    %c7_i32_70 = arith.constant 7 : i32
    %c0_i32_71 = arith.constant 0 : i32
    %c0_i32_72 = arith.constant 0 : i32
    %87 = tpu.memref_slice %arg2[%c0_i32_71, %c0_i32_72] : memref<512x128xf32, #tpu.memory_space<any>> -> memref<1x128xf32, #tpu.memory_space<any>>
    %c7_i32_73 = arith.constant 7 : i32
    %c0_i32_74 = arith.constant 0 : i32
    %88 = tpu.memref_slice %arg12[%c7_i32_73, %c0_i32_74] : memref<8x128xf32, #tpu.memory_space<vmem>> -> memref<1x128xf32, #tpu.memory_space<vmem>>
    %89 = tpu.memref_slice %arg13[%c7_i32_70] : memref<8x!tpu.dma_semaphore, #tpu.memory_space<semaphore_mem>> -> memref<1x!tpu.dma_semaphore, #tpu.memory_space<semaphore_mem>>
    %90 = tpu.memref_squeeze %89 : memref<1x!tpu.dma_semaphore, #tpu.memory_space<semaphore_mem>> -> memref<!tpu.dma_semaphore, #tpu.memory_space<semaphore_mem>>
    tpu.wait_dma2 semaphore(%90 : memref<!tpu.dma_semaphore, #tpu.memory_space<semaphore_mem>>) src(%87 : memref<1x128xf32, #tpu.memory_space<any>>) dst(%88 : memref<1x128xf32, #tpu.memory_space<vmem>>)
    %c0_75 = arith.constant 0 : index
    %c0_76 = arith.constant 0 : index
    %91 = vector.load %arg12[%c0_75, %c0_76] : memref<8x128xf32, #tpu.memory_space<vmem>>, vector<8x128xf32>
    %c0_77 = arith.constant 0 : index
    %c0_78 = arith.constant 0 : index
    %92 = vector.load %arg4[%c0_77, %c0_78] : memref<8x128xf32, #tpu.memory_space<vmem>>, vector<8x128xf32>
    %93 = arith.addf %91, %92 : vector<8x128xf32>
    %c0_79 = arith.constant 0 : index
    %c0_80 = arith.constant 0 : index
    %94 = vector.load %arg3[%c0_79, %c0_80] : memref<8x1xf32, #tpu.memory_space<vmem>>, vector<8x1xf32>
    %c0_81 = arith.constant 0 : index
    %c0_82 = arith.constant 0 : index
    %95 = vector.load %arg5[%c0_81, %c0_82] : memref<1x128xf32, #tpu.memory_space<vmem>>, vector<1x128xf32>
    %96 = vector.broadcast %94 : vector<8x1xf32> to vector<8x128xf32>
    %97 = vector.broadcast %95 : vector<1x128xf32> to vector<8x128xf32>
    %98 = arith.mulf %96, %97 : vector<8x128xf32>
    %99 = arith.addf %93, %98 : vector<8x128xf32>
    %cst = arith.constant dense<0.000000e+00> : vector<8xf32>
    %100 = vector.multi_reduction <add>, %99, %cst [1] : vector<8x128xf32> to vector<8xf32>
    %101 = vector.shape_cast %100 : vector<8xf32> to vector<8x1xf32>
    %cst_83 = arith.constant 1.280000e+02 : f32
    %102 = vector.broadcast %cst_83 : f32 to vector<8x1xf32>
    %103 = arith.divf %101, %102 : vector<8x1xf32>
    %104 = vector.broadcast %103 : vector<8x1xf32> to vector<8x128xf32>
    %105 = arith.subf %99, %104 : vector<8x128xf32>
    %106 = vector.broadcast %103 : vector<8x1xf32> to vector<8x128xf32>
    %107 = arith.subf %99, %106 : vector<8x128xf32>
    %108 = arith.mulf %105, %107 : vector<8x128xf32>
    %cst_84 = arith.constant dense<0.000000e+00> : vector<8xf32>
    %109 = vector.multi_reduction <add>, %108, %cst_84 [1] : vector<8x128xf32> to vector<8xf32>
    %110 = vector.shape_cast %109 : vector<8xf32> to vector<8x1xf32>
    %cst_85 = arith.constant 1.280000e+02 : f32
    %111 = vector.broadcast %cst_85 : f32 to vector<8x1xf32>
    %112 = arith.divf %110, %111 : vector<8x1xf32>
    %113 = vector.broadcast %103 : vector<8x1xf32> to vector<8x128xf32>
    %114 = arith.subf %99, %113 : vector<8x128xf32>
    %cst_86 = arith.constant 9.99999996E-13 : f32
    %115 = vector.broadcast %cst_86 : f32 to vector<8x1xf32>
    %116 = arith.addf %112, %115 : vector<8x1xf32>
    %117 = math.rsqrt %116 : vector<8x1xf32>
    %118 = vector.broadcast %117 : vector<8x1xf32> to vector<8x128xf32>
    %119 = arith.mulf %114, %118 : vector<8x128xf32>
    %120 = vector.broadcast %0 : vector<1x128xf32> to vector<8x128xf32>
    %121 = arith.mulf %119, %120 : vector<8x128xf32>
    %122 = vector.broadcast %1 : vector<1x128xf32> to vector<8x128xf32>
    %123 = arith.addf %121, %122 : vector<8x128xf32>
    %c0_87 = arith.constant 0 : index
    %124 = memref.load %arg10[%c0_87] : memref<5xf32, #tpu.memory_space<smem>>
    %125 = vector.broadcast %124 : f32 to vector<8x128xf32>
    %126 = arith.mulf %125, %123 : vector<8x128xf32>
    %c0_i32_88 = arith.constant 0 : i32
    %127 = arith.truncf %123 : vector<8x128xf32> to vector<8x128xbf16>
    %128 = arith.index_cast %c0_i32_88 : i32 to index
    %c0_89 = arith.constant 0 : index
    %c0_90 = arith.constant 0 : index
    %129 = vector.load %arg8[%128, %c0_89, %c0_90] : memref<4x128x128xbf16, #tpu.memory_space<vmem>>, vector<1x128x128xbf16>
    %130 = vector.shape_cast %129 : vector<1x128x128xbf16> to vector<128x128xbf16>
    %cst_91 = arith.constant dense<0.000000e+00> : vector<8x128xf32>
    %131 = tpu.matmul %127, %130, %cst_91 {dimension_numbers = #tpu.dot_dimension_numbers<[1], [0], [0], [1], [0, 0, 1, 1], [], []>} : vector<8x128xbf16>, vector<128x128xbf16>, vector<8x128xf32> -> vector<8x128xf32>
    %132 = arith.index_cast %c0_i32_88 : i32 to index
    %c0_92 = arith.constant 0 : index
    %c0_93 = arith.constant 0 : index
    %133 = vector.load %arg9[%132, %c0_92, %c0_93] : memref<4x1x128xf32, #tpu.memory_space<vmem>>, vector<1x1x128xf32>
    %134 = vector.shape_cast %133 : vector<1x1x128xf32> to vector<1x128xf32>
    %135 = vector.broadcast %134 : vector<1x128xf32> to vector<8x128xf32>
    %136 = arith.addf %131, %135 : vector<8x128xf32>
    %137 = arith.mulf %136, %136 : vector<8x128xf32>
    %138 = arith.mulf %136, %137 : vector<8x128xf32>
    %cst_94 = arith.constant 4.471500e-02 : f32
    %139 = vector.broadcast %cst_94 : f32 to vector<8x128xf32>
    %140 = arith.mulf %139, %138 : vector<8x128xf32>
    %141 = arith.addf %136, %140 : vector<8x128xf32>
    %cst_95 = arith.constant 0.797884583 : f32
    %142 = vector.broadcast %cst_95 : f32 to vector<8x128xf32>
    %143 = arith.mulf %142, %141 : vector<8x128xf32>
    %144 = math.tanh %143 : vector<8x128xf32>
    %cst_96 = arith.constant 1.000000e+00 : f32
    %145 = vector.broadcast %cst_96 : f32 to vector<8x128xf32>
    %146 = arith.addf %145, %144 : vector<8x128xf32>
    %cst_97 = arith.constant 5.000000e-01 : f32
    %147 = vector.broadcast %cst_97 : f32 to vector<8x128xf32>
    %148 = arith.mulf %147, %146 : vector<8x128xf32>
    %149 = arith.mulf %136, %148 : vector<8x128xf32>
    %c1_i32_98 = arith.constant 1 : i32
    %150 = arith.addi %c0_i32_88, %c1_i32_98 : i32
    %151 = arith.index_cast %150 : i32 to index
    %152 = memref.load %arg10[%151] : memref<5xf32, #tpu.memory_space<smem>>
    %153 = vector.broadcast %152 : f32 to vector<8x128xf32>
    %154 = arith.mulf %153, %149 : vector<8x128xf32>
    %155 = arith.addf %126, %154 : vector<8x128xf32>
    %c1_i32_99 = arith.constant 1 : i32
    %156 = arith.truncf %149 : vector<8x128xf32> to vector<8x128xbf16>
    %157 = arith.index_cast %c1_i32_99 : i32 to index
    %c0_100 = arith.constant 0 : index
    %c0_101 = arith.constant 0 : index
    %158 = vector.load %arg8[%157, %c0_100, %c0_101] : memref<4x128x128xbf16, #tpu.memory_space<vmem>>, vector<1x128x128xbf16>
    %159 = vector.shape_cast %158 : vector<1x128x128xbf16> to vector<128x128xbf16>
    %cst_102 = arith.constant dense<0.000000e+00> : vector<8x128xf32>
    %160 = tpu.matmul %156, %159, %cst_102 {dimension_numbers = #tpu.dot_dimension_numbers<[1], [0], [0], [1], [0, 0, 1, 1], [], []>} : vector<8x128xbf16>, vector<128x128xbf16>, vector<8x128xf32> -> vector<8x128xf32>
    %161 = arith.index_cast %c1_i32_99 : i32 to index
    %c0_103 = arith.constant 0 : index
    %c0_104 = arith.constant 0 : index
    %162 = vector.load %arg9[%161, %c0_103, %c0_104] : memref<4x1x128xf32, #tpu.memory_space<vmem>>, vector<1x1x128xf32>
    %163 = vector.shape_cast %162 : vector<1x1x128xf32> to vector<1x128xf32>
    %164 = vector.broadcast %163 : vector<1x128xf32> to vector<8x128xf32>
    %165 = arith.addf %160, %164 : vector<8x128xf32>
    %166 = arith.mulf %165, %165 : vector<8x128xf32>
    %167 = arith.mulf %165, %166 : vector<8x128xf32>
    %cst_105 = arith.constant 4.471500e-02 : f32
    %168 = vector.broadcast %cst_105 : f32 to vector<8x128xf32>
    %169 = arith.mulf %168, %167 : vector<8x128xf32>
    %170 = arith.addf %165, %169 : vector<8x128xf32>
    %cst_106 = arith.constant 0.797884583 : f32
    %171 = vector.broadcast %cst_106 : f32 to vector<8x128xf32>
    %172 = arith.mulf %171, %170 : vector<8x128xf32>
    %173 = math.tanh %172 : vector<8x128xf32>
    %cst_107 = arith.constant 1.000000e+00 : f32
    %174 = vector.broadcast %cst_107 : f32 to vector<8x128xf32>
    %175 = arith.addf %174, %173 : vector<8x128xf32>
    %cst_108 = arith.constant 5.000000e-01 : f32
    %176 = vector.broadcast %cst_108 : f32 to vector<8x128xf32>
    %177 = arith.mulf %176, %175 : vector<8x128xf32>
    %178 = arith.mulf %165, %177 : vector<8x128xf32>
    %c1_i32_109 = arith.constant 1 : i32
    %179 = arith.addi %c1_i32_99, %c1_i32_109 : i32
    %180 = arith.index_cast %179 : i32 to index
    %181 = memref.load %arg10[%180] : memref<5xf32, #tpu.memory_space<smem>>
    %182 = vector.broadcast %181 : f32 to vector<8x128xf32>
    %183 = arith.mulf %182, %178 : vector<8x128xf32>
    %184 = arith.addf %155, %183 : vector<8x128xf32>
    %c2_i32_110 = arith.constant 2 : i32
    %185 = arith.truncf %178 : vector<8x128xf32> to vector<8x128xbf16>
    %186 = arith.index_cast %c2_i32_110 : i32 to index
    %c0_111 = arith.constant 0 : index
    %c0_112 = arith.constant 0 : index
    %187 = vector.load %arg8[%186, %c0_111, %c0_112] : memref<4x128x128xbf16, #tpu.memory_space<vmem>>, vector<1x128x128xbf16>
    %188 = vector.shape_cast %187 : vector<1x128x128xbf16> to vector<128x128xbf16>
    %cst_113 = arith.constant dense<0.000000e+00> : vector<8x128xf32>
    %189 = tpu.matmul %185, %188, %cst_113 {dimension_numbers = #tpu.dot_dimension_numbers<[1], [0], [0], [1], [0, 0, 1, 1], [], []>} : vector<8x128xbf16>, vector<128x128xbf16>, vector<8x128xf32> -> vector<8x128xf32>
    %190 = arith.index_cast %c2_i32_110 : i32 to index
    %c0_114 = arith.constant 0 : index
    %c0_115 = arith.constant 0 : index
    %191 = vector.load %arg9[%190, %c0_114, %c0_115] : memref<4x1x128xf32, #tpu.memory_space<vmem>>, vector<1x1x128xf32>
    %192 = vector.shape_cast %191 : vector<1x1x128xf32> to vector<1x128xf32>
    %193 = vector.broadcast %192 : vector<1x128xf32> to vector<8x128xf32>
    %194 = arith.addf %189, %193 : vector<8x128xf32>
    %195 = arith.mulf %194, %194 : vector<8x128xf32>
    %196 = arith.mulf %194, %195 : vector<8x128xf32>
    %cst_116 = arith.constant 4.471500e-02 : f32
    %197 = vector.broadcast %cst_116 : f32 to vector<8x128xf32>
    %198 = arith.mulf %197, %196 : vector<8x128xf32>
    %199 = arith.addf %194, %198 : vector<8x128xf32>
    %cst_117 = arith.constant 0.797884583 : f32
    %200 = vector.broadcast %cst_117 : f32 to vector<8x128xf32>
    %201 = arith.mulf %200, %199 : vector<8x128xf32>
    %202 = math.tanh %201 : vector<8x128xf32>
    %cst_118 = arith.constant 1.000000e+00 : f32
    %203 = vector.broadcast %cst_118 : f32 to vector<8x128xf32>
    %204 = arith.addf %203, %202 : vector<8x128xf32>
    %cst_119 = arith.constant 5.000000e-01 : f32
    %205 = vector.broadcast %cst_119 : f32 to vector<8x128xf32>
    %206 = arith.mulf %205, %204 : vector<8x128xf32>
    %207 = arith.mulf %194, %206 : vector<8x128xf32>
    %c1_i32_120 = arith.constant 1 : i32
    %208 = arith.addi %c2_i32_110, %c1_i32_120 : i32
    %209 = arith.index_cast %208 : i32 to index
    %210 = memref.load %arg10[%209] : memref<5xf32, #tpu.memory_space<smem>>
    %211 = vector.broadcast %210 : f32 to vector<8x128xf32>
    %212 = arith.mulf %211, %207 : vector<8x128xf32>
    %213 = arith.addf %184, %212 : vector<8x128xf32>
    %c3_i32_121 = arith.constant 3 : i32
    %214 = arith.truncf %207 : vector<8x128xf32> to vector<8x128xbf16>
    %215 = arith.index_cast %c3_i32_121 : i32 to index
    %c0_122 = arith.constant 0 : index
    %c0_123 = arith.constant 0 : index
    %216 = vector.load %arg8[%215, %c0_122, %c0_123] : memref<4x128x128xbf16, #tpu.memory_space<vmem>>, vector<1x128x128xbf16>
    %217 = vector.shape_cast %216 : vector<1x128x128xbf16> to vector<128x128xbf16>
    %cst_124 = arith.constant dense<0.000000e+00> : vector<8x128xf32>
    %218 = tpu.matmul %214, %217, %cst_124 {dimension_numbers = #tpu.dot_dimension_numbers<[1], [0], [0], [1], [0, 0, 1, 1], [], []>} : vector<8x128xbf16>, vector<128x128xbf16>, vector<8x128xf32> -> vector<8x128xf32>
    %219 = arith.index_cast %c3_i32_121 : i32 to index
    %c0_125 = arith.constant 0 : index
    %c0_126 = arith.constant 0 : index
    %220 = vector.load %arg9[%219, %c0_125, %c0_126] : memref<4x1x128xf32, #tpu.memory_space<vmem>>, vector<1x1x128xf32>
    %221 = vector.shape_cast %220 : vector<1x1x128xf32> to vector<1x128xf32>
    %222 = vector.broadcast %221 : vector<1x128xf32> to vector<8x128xf32>
    %223 = arith.addf %218, %222 : vector<8x128xf32>
    %224 = arith.mulf %223, %223 : vector<8x128xf32>
    %225 = arith.mulf %223, %224 : vector<8x128xf32>
    %cst_127 = arith.constant 4.471500e-02 : f32
    %226 = vector.broadcast %cst_127 : f32 to vector<8x128xf32>
    %227 = arith.mulf %226, %225 : vector<8x128xf32>
    %228 = arith.addf %223, %227 : vector<8x128xf32>
    %cst_128 = arith.constant 0.797884583 : f32
    %229 = vector.broadcast %cst_128 : f32 to vector<8x128xf32>
    %230 = arith.mulf %229, %228 : vector<8x128xf32>
    %231 = math.tanh %230 : vector<8x128xf32>
    %cst_129 = arith.constant 1.000000e+00 : f32
    %232 = vector.broadcast %cst_129 : f32 to vector<8x128xf32>
    %233 = arith.addf %232, %231 : vector<8x128xf32>
    %cst_130 = arith.constant 5.000000e-01 : f32
    %234 = vector.broadcast %cst_130 : f32 to vector<8x128xf32>
    %235 = arith.mulf %234, %233 : vector<8x128xf32>
    %236 = arith.mulf %223, %235 : vector<8x128xf32>
    %c1_i32_131 = arith.constant 1 : i32
    %237 = arith.addi %c3_i32_121, %c1_i32_131 : i32
    %238 = arith.index_cast %237 : i32 to index
    %239 = memref.load %arg10[%238] : memref<5xf32, #tpu.memory_space<smem>>
    %240 = vector.broadcast %239 : f32 to vector<8x128xf32>
    %241 = arith.mulf %240, %236 : vector<8x128xf32>
    %242 = arith.addf %213, %241 : vector<8x128xf32>
    %c4_i32_132 = arith.constant 4 : i32
    %c0_133 = arith.constant 0 : index
    %c0_134 = arith.constant 0 : index
    %243 = vector.load %arg11[%c0_133, %c0_134] : memref<8x128xf32, #tpu.memory_space<vmem>>, vector<8x128xf32>
    tpu.vector_store %arg11[%c0_133, %c0_134], %242 {strides = array<i32>} : memref<8x128xf32, #tpu.memory_space<vmem>>, vector<8x128xf32>,
    return
  }
  func.func @transform_1(%arg0: i32, %arg1: memref<16xi32, #tpu.memory_space<smem>>) -> (i32, i32) {
    %c0_i32 = arith.constant 0 : i32
    %c0_i32_0 = arith.constant 0 : i32
    return %arg0, %c0_i32 : i32, i32
  }
  func.func @transform_2(%arg0: i32, %arg1: memref<16xi32, #tpu.memory_space<smem>>) -> (i32, i32) {
    %c0_i32 = arith.constant 0 : i32
    %c0_i32_0 = arith.constant 0 : i32
    %c0_i32_1 = arith.constant 0 : i32
    return %c0_i32, %c0_i32_0 : i32, i32
  }
  func.func @transform_3(%arg0: i32, %arg1: memref<16xi32, #tpu.memory_space<smem>>) -> (i32, i32) {
    %c0_i32 = arith.constant 0 : i32
    %c0_i32_0 = arith.constant 0 : i32
    %c0_i32_1 = arith.constant 0 : i32
    return %c0_i32, %c0_i32_0 : i32, i32
  }
  func.func @transform_4(%arg0: i32, %arg1: memref<16xi32, #tpu.memory_space<smem>>) -> (i32, i32) {
    %c0_i32 = arith.constant 0 : i32
    %c0_i32_0 = arith.constant 0 : i32
    %c0_i32_1 = arith.constant 0 : i32
    return %c0_i32, %c0_i32_0 : i32, i32
  }
  func.func @transform_5(%arg0: i32, %arg1: memref<16xi32, #tpu.memory_space<smem>>) -> (i32, i32) {
    %c0_i32 = arith.constant 0 : i32
    %c0_i32_0 = arith.constant 0 : i32
    %c0_i32_1 = arith.constant 0 : i32
    return %c0_i32, %c0_i32_0 : i32, i32
  }
  func.func @transform_6(%arg0: i32, %arg1: memref<16xi32, #tpu.memory_space<smem>>) -> (i32, i32, i32) {
    %c0_i32 = arith.constant 0 : i32
    %c0_i32_0 = arith.constant 0 : i32
    %c0_i32_1 = arith.constant 0 : i32
    %c0_i32_2 = arith.constant 0 : i32
    return %c0_i32, %c0_i32_0, %c0_i32_1 : i32, i32, i32
  }
  func.func @transform_7(%arg0: i32, %arg1: memref<16xi32, #tpu.memory_space<smem>>) -> (i32, i32, i32) {
    %c0_i32 = arith.constant 0 : i32
    %c0_i32_0 = arith.constant 0 : i32
    %c0_i32_1 = arith.constant 0 : i32
    %c0_i32_2 = arith.constant 0 : i32
    return %c0_i32, %c0_i32_0, %c0_i32_1 : i32, i32, i32
  }
  func.func @transform_8(%arg0: i32, %arg1: memref<16xi32, #tpu.memory_space<smem>>) -> i32 {
    %c0_i32 = arith.constant 0 : i32
    %c0_i32_0 = arith.constant 0 : i32
    return %c0_i32 : i32
  }
  func.func @transform_9(%arg0: i32, %arg1: memref<16xi32, #tpu.memory_space<smem>>) -> (i32, i32) {
    %c0_i32 = arith.constant 0 : i32
    %c0_i32_0 = arith.constant 0 : i32
    return %arg0, %c0_i32 : i32, i32
  }
}

</mosaic_0001>

<llo_original>
// kernel: tpu_custom_call.1
$region0: #{tpu_custom_call.1}
  #allocation0 [shape = 'u32[]', space=smem, size = 0x4, offset = 0x4, fixed_abs, tag = 'smem constant byte address 0x4 - core index']
  #allocation1 [shape = 'u32[144,128]{1,0:T(1,128)}', space=vmem, size = 0x12000, scoped, tag = 'internal scratch']
  #allocation2 [shape = 'f32[8,128]{1,0:T(8,128)}', space=vmem, size = 0x1000, scoped, tag = 'scratch operand']
  #allocation3 [shape = 's32[8]{0}', space=sflag, size = 0x20, scoped, tag = 'scratch operand']
  #allocation4 [shape = 's32[1]{0}', space=sflag, size = 0x4, scoped, tag = 'scoped memory for tpu_custom_call.1']
  #allocation5 [shape = 'u8[512]{0}', space=smem, size = 0x200, scoped, tag = 'prefetched SMEM operand 0']
  #allocation12 [shape = 's32[]', space=sflag, size = 0x4, offset = 0, fixed_abs, tag = 'sflag constant byte address 0x0 - dummy sync flag']
  #allocation13 [shape = 's32[]', space=sflag, size = 0x4, offset = 0, fixed_abs, tag = 'sflag constant byte address 0x0 - dummy sync flag']
  #allocation14 [shape = 'u32[]', space=smem, size = 0x4, offset = 0x44, fixed_abs, tag = 'smem constant byte address 0x44 - assertion arg 0']
  #allocation15 [shape = 'u32[]', space=smem, size = 0x4, offset = 0x48, fixed_abs, tag = 'smem constant byte address 0x48 - assertion arg 1']
  #allocation16 [shape = 's32[]', space=sflag, size = 0x4, offset = 0, fixed_abs, tag = 'sflag constant byte address 0x0 - dummy sync flag']
  #allocation17 [shape = 's32[]', space=sflag, size = 0x4, offset = 0, fixed_abs, tag = 'sflag constant byte address 0x0 - dummy sync flag']
  #allocation18 [shape = 's32[]', space=sflag, size = 0x4, offset = 0, fixed_abs, tag = 'sflag constant byte address 0x0 - dummy sync flag']
  #allocation19 [shape = 's32[]', space=sflag, size = 0x4, offset = 0, fixed_abs, tag = 'sflag constant byte address 0x0 - dummy sync flag']
  #allocation20 [shape = 's32[]', space=sflag, size = 0x4, offset = 0, fixed_abs, tag = 'sflag constant byte address 0x0 - dummy sync flag']
  #allocation21 [shape = 's32[]', space=sflag, size = 0x4, offset = 0, fixed_abs, tag = 'sflag constant byte address 0x0 - dummy sync flag']
  #allocation22 [shape = 's32[]', space=sflag, size = 0x4, offset = 0, fixed_abs, tag = 'sflag constant byte address 0x0 - dummy sync flag']
  #allocation23 [shape = 's32[]', space=sflag, size = 0x4, offset = 0, fixed_abs, tag = 'sflag constant byte address 0x0 - dummy sync flag']
  #allocation24 [shape = 's32[]', space=sflag, size = 0x4, offset = 0, fixed_abs, tag = 'sflag constant byte address 0x0 - dummy sync flag']
  #allocation25 [shape = 's32[]', space=sflag, size = 0x4, offset = 0, fixed_abs, tag = 'sflag constant byte address 0x0 - dummy sync flag']
  #allocation26 [shape = 's32[]', space=sflag, size = 0x4, offset = 0, fixed_abs, tag = 'sflag constant byte address 0x0 - dummy sync flag']
  #allocation27 [shape = 's32[]', space=sflag, size = 0x4, offset = 0, fixed_abs, tag = 'sflag constant byte address 0x0 - dummy sync flag']
  #allocation28 [shape = 's32[]', space=sflag, size = 0x4, offset = 0, fixed_abs, tag = 'sflag constant byte address 0x0 - dummy sync flag']
  #allocation29 [shape = 's32[]', space=sflag, size = 0x4, offset = 0, fixed_abs, tag = 'sflag constant byte address 0x0 - dummy sync flag']
  %s0 = inlined_call_operand.vmem [shape: s32[16], index: 0, kind: input, shape index: {}]
  %s1 = inlined_call_operand.hbm [shape: f32[512,128], index: 1, kind: input, shape index: {}]
  %s2 = inlined_call_operand.vmem [shape: f32[16,1], index: 2, kind: input, shape index: {}]
  %s3 = inlined_call_operand.vmem [shape: f32[8,128], index: 3, kind: input, shape index: {}]
  %s4 = inlined_call_operand.vmem [shape: f32[1,128], index: 4, kind: input, shape index: {}]
  %s5 = inlined_call_operand.vmem [shape: f32[1,128], index: 5, kind: input, shape index: {}]
  %s6 = inlined_call_operand.vmem [shape: f32[1,128], index: 6, kind: input, shape index: {}]
  %s7 = inlined_call_operand.hbm [shape: bf16[4,128,128], index: 7, kind: input, shape index: {}]
  %s8 = inlined_call_operand.vmem [shape: f32[4,1,128], index: 8, kind: input, shape index: {}]
  %s9 = inlined_call_operand.vmem [shape: f32[5], index: 9, kind: input, shape index: {}]
  %s10 = inlined_call_operand.hbm [shape: f32[16,128], index: 10, kind: output, shape index: {}]
  %s11 = sld [smem:[#allocation0]]
  $region105: #{tpu_custom_call.1} parent=0
    _
  %s13 = ssub.s32 1, %s11
  %s14 = scalar_select 0, %s13, %s11
  %s15 = sshll.u32 %s0, 4
  %s16 = int_to_ptr.vmem [resolvable:$true] %s15
  %18 = dma.vmem_to_smem %s16, 16, [#allocation5], [#allocation4]
  %19 = dma.done [#allocation4], 16
  %20 = sfence
  $region1: #{tpu_custom_call.1} parent=0
    #allocation6 [shape = 'u8[131072]{0}', space=vmem, size = 0x20000, scoped, tag = 'input window, operand 7, single buffered']
    #allocation7 [shape = 's32[2]{0}', space=sflag, size = 0x8, scoped, tag = 'scoped memory for tpu_custom_call.1']
    #allocation8 [shape = 's32[2]{0}', space=sflag, size = 0x8, scoped, tag = 'scoped memory for tpu_custom_call.1']
    #allocation9 [shape = 's32[2]{0}', space=sflag, size = 0x8, scoped, tag = 'scoped memory for tpu_custom_call.1']
    #allocation10 [shape = 'u8[512]{0}', space=smem, size = 0x200, scoped, tag = 'input window, operand 9, single buffered']
    #allocation11 [shape = 'u8[8192]{0}', space=vmem, size = 0x2000, scoped, tag = 'output window, operand 0']
    %21 = vsyncpa [#allocation7], 0
    %22 = vsyncpa [#allocation9], 0
    %23 = vsyncpa [#allocation8], 0
    %s24 = scalar_lea.sflag [#allocation8], 1
    %25 = vsyncpa %s24, 0
    loop: start=0, step=1, limit=4
    $region2: #{tpu_custom_call.1} parent=1 // loop_pre_header
      _
    $region3: #{tpu_custom_call.1} parent=1 // loop_header
      %s27 = sphi 0, %s31
      %p28 = scmp.ge.s32.totalorder %s27, 4
      %s37 = sphi 0, %s39
      %s40 = sphi 0, %s37
      %s41 = sphi 0, %s40
      %s57 = sphi 0, %s41
      %s61 = sphi 0, %s61
      %s63 = sphi 0, %s61
      %s64 = sphi 0, %s63
      %s78 = sphi 0, %s64
      %s82 = sphi 0, %s82
      %s84 = sphi 0, %s82
      %s85 = sphi 0, %s84
      %s99 = sphi 0, %s85
      %s103 = sphi 0, %s103
      %s105 = sphi 0, %s103
      %s106 = sphi 0, %s105
      %s120 = sphi 0, %s106
      %s124 = sphi 0, %s124
      %s126 = sphi 0, %s124
      %s127 = sphi 0, %s126
      %s141 = sphi 0, %s127
      %s145 = sphi 0, %s145
      %s147 = sphi 0, %s145
      %s148 = sphi 0, %s147
      %s162 = sphi 0, %s148
      %s166 = sphi 0, %s166
      %s168 = sphi 0, %s166
      %s169 = sphi 0, %s168
      %s183 = sphi 0, %s169
      %s187 = sphi 0, %s187
      %s189 = sphi 0, %s187
      %s190 = sphi 0, %s189
      %s204 = sphi 0, %s190
      %s210 = sphi 0, %s212
      %s213 = sphi 0, %s210
      %s214 = sphi 0, %s213
      %s230 = sphi 0, %s214
    $region4: #{tpu_custom_call.1} parent=1 // loop_header_branch
      %30 = sbr.rel (%p28) target = $region8
    $region5: #{tpu_custom_call.1} parent=1 // loop_body
      %s32 = ssub.s32 %s27, 1
      %s33 = ssub.s32 %s27, 2
      %s34 = sadd.s32 %s27, 1
      %s35 = ssub.s32 %s27, %s34
      %p36 = scmp.eq.s32.totalorder %s35, 0
      %s38 = sadd.s32 %s37, 1
      %s39 = scalar_select %p36, %s37, %s38
      %p42 = pneg %p36
      %p43 = scmp.eq.s32.totalorder %s27, 1
      %p44 = por %p42, %p43
      %p45 = scmp.ne.s32.totalorder %s37, %s40
      %p46 = scmp.eq.s32.totalorder %s27, 0
      %p47 = por %p45, %p46
      %p48 = scmp.ne.s32.totalorder %s37, %s40
      %p49 = scmp.eq.s32.totalorder %s32, 1
      %p50 = por %p48, %p49
      %p51 = scmp.ne.s32.totalorder %s40, %s41
      %p52 = scmp.eq.s32.totalorder %s32, 0
      %p53 = por %p51, %p52
      %p54 = scmp.ne.s32.totalorder %s40, %s41
      %p55 = scmp.eq.s32.totalorder %s33, 1
      %p56 = por %p54, %p55
      %p58 = scmp.ne.s32.totalorder %s41, %s57
      %p59 = scmp.eq.s32.totalorder %s33, 0
      %p60 = por %p58, %p59
      %s62 = sadd.s32 %s61, 1
      %p65 = scmp.eq.s32.totalorder %s27, 1
      %p66 = scmp.ne.s32.totalorder %s61, %s63
      %p67 = scmp.eq.s32.totalorder %s27, 0
      %p68 = por %p66, %p67
      %p69 = scmp.ne.s32.totalorder %s61, %s63
      %p70 = scmp.eq.s32.totalorder %s32, 1
      %p71 = por %p69, %p70
      %p72 = scmp.ne.s32.totalorder %s63, %s64
      %p73 = scmp.eq.s32.totalorder %s32, 0
      %p74 = por %p72, %p73
      %p75 = scmp.ne.s32.totalorder %s63, %s64
      %p76 = scmp.eq.s32.totalorder %s33, 1
      %p77 = por %p75, %p76
      %p79 = scmp.ne.s32.totalorder %s64, %s78
      %p80 = scmp.eq.s32.totalorder %s33, 0
      %p81 = por %p79, %p80
      %s83 = sadd.s32 %s82, 1
      %p86 = scmp.eq.s32.totalorder %s27, 1
      %p87 = scmp.ne.s32.totalorder %s82, %s84
      %p88 = scmp.eq.s32.totalorder %s27, 0
      %p89 = por %p87, %p88
      %p90 = scmp.ne.s32.totalorder %s82, %s84
      %p91 = scmp.eq.s32.totalorder %s32, 1
      %p92 = por %p90, %p91
      %p93 = scmp.ne.s32.totalorder %s84, %s85
      %p94 = scmp.eq.s32.totalorder %s32, 0
      %p95 = por %p93, %p94
      %p96 = scmp.ne.s32.totalorder %s84, %s85
      %p97 = scmp.eq.s32.totalorder %s33, 1
      %p98 = por %p96, %p97
      %p100 = scmp.ne.s32.totalorder %s85, %s99
      %p101 = scmp.eq.s32.totalorder %s33, 0
      %p102 = por %p100, %p101
      %s104 = sadd.s32 %s103, 1
      %p107 = scmp.eq.s32.totalorder %s27, 1
      %p108 = scmp.ne.s32.totalorder %s103, %s105
      %p109 = scmp.eq.s32.totalorder %s27, 0
      %p110 = por %p108, %p109
      %p111 = scmp.ne.s32.totalorder %s103, %s105
      %p112 = scmp.eq.s32.totalorder %s32, 1
      %p113 = por %p111, %p112
      %p114 = scmp.ne.s32.totalorder %s105, %s106
      %p115 = scmp.eq.s32.totalorder %s32, 0
      %p116 = por %p114, %p115
      %p117 = scmp.ne.s32.totalorder %s105, %s106
      %p118 = scmp.eq.s32.totalorder %s33, 1
      %p119 = por %p117, %p118
      %p121 = scmp.ne.s32.totalorder %s106, %s120
      %p122 = scmp.eq.s32.totalorder %s33, 0
      %p123 = por %p121, %p122
      %s125 = sadd.s32 %s124, 1
      %p128 = scmp.eq.s32.totalorder %s27, 1
      %p129 = scmp.ne.s32.totalorder %s124, %s126
      %p130 = scmp.eq.s32.totalorder %s27, 0
      %p131 = por %p129, %p130
      %p132 = scmp.ne.s32.totalorder %s124, %s126
      %p133 = scmp.eq.s32.totalorder %s32, 1
      %p134 = por %p132, %p133
      %p135 = scmp.ne.s32.totalorder %s126, %s127
      %p136 = scmp.eq.s32.totalorder %s32, 0
      %p137 = por %p135, %p136
      %p138 = scmp.ne.s32.totalorder %s126, %s127
      %p139 = scmp.eq.s32.totalorder %s33, 1
      %p140 = por %p138, %p139
      %p142 = scmp.ne.s32.totalorder %s127, %s141
      %p143 = scmp.eq.s32.totalorder %s33, 0
      %p144 = por %p142, %p143
      %s146 = sadd.s32 %s145, 1
      %p149 = scmp.eq.s32.totalorder %s27, 1
      %p150 = scmp.ne.s32.totalorder %s145, %s147
      %p151 = scmp.eq.s32.totalorder %s27, 0
      %p152 = por %p150, %p151
      %p153 = scmp.ne.s32.totalorder %s145, %s147
      %p154 = scmp.eq.s32.totalorder %s32, 1
      %p155 = por %p153, %p154
      %p156 = scmp.ne.s32.totalorder %s147, %s148
      %p157 = scmp.eq.s32.totalorder %s32, 0
      %p158 = por %p156, %p157
      %p159 = scmp.ne.s32.totalorder %s147, %s148
      %p160 = scmp.eq.s32.totalorder %s33, 1
      %p161 = por %p159, %p160
      %p163 = scmp.ne.s32.totalorder %s148, %s162
      %p164 = scmp.eq.s32.totalorder %s33, 0
      %p165 = por %p163, %p164
      %s167 = sadd.s32 %s166, 1
      %p170 = scmp.eq.s32.totalorder %s27, 1
      %p171 = scmp.ne.s32.totalorder %s166, %s168
      %p172 = scmp.eq.s32.totalorder %s27, 0
      %p173 = por %p171, %p172
      %p174 = scmp.ne.s32.totalorder %s166, %s168
      %p175 = scmp.eq.s32.totalorder %s32, 1
      %p176 = por %p174, %p175
      %p177 = scmp.ne.s32.totalorder %s168, %s169
      %p178 = scmp.eq.s32.totalorder %s32, 0
      %p179 = por %p177, %p178
      %p180 = scmp.ne.s32.totalorder %s168, %s169
      %p181 = scmp.eq.s32.totalorder %s33, 1
      %p182 = por %p180, %p181
      %p184 = scmp.ne.s32.totalorder %s169, %s183
      %p185 = scmp.eq.s32.totalorder %s33, 0
      %p186 = por %p184, %p185
      %s188 = sadd.s32 %s187, 1
      %p191 = scmp.eq.s32.totalorder %s27, 1
      %p192 = scmp.ne.s32.totalorder %s187, %s189
      %p193 = scmp.eq.s32.totalorder %s27, 0
      %p194 = por %p192, %p193
      %p195 = scmp.ne.s32.totalorder %s187, %s189
      %p196 = scmp.eq.s32.totalorder %s32, 1
      %p197 = por %p195, %p196
      %p198 = scmp.ne.s32.totalorder %s189, %s190
      %p199 = scmp.eq.s32.totalorder %s32, 0
      %p200 = por %p198, %p199
      %p201 = scmp.ne.s32.totalorder %s189, %s190
      %p202 = scmp.eq.s32.totalorder %s33, 1
      %p203 = por %p201, %p202
      %p205 = scmp.ne.s32.totalorder %s190, %s204
      %p206 = scmp.eq.s32.totalorder %s33, 0
      %p207 = por %p205, %p206
      %s208 = ssub.s32 %s27, %s34
      %p209 = scmp.eq.s32.totalorder %s208, 0
      %s211 = sadd.s32 %s210, 1
      %s212 = scalar_select %p209, %s210, %s211
      %p215 = pneg %p209
      %p216 = scmp.eq.s32.totalorder %s27, 1
      %p217 = por %p215, %p216
      %p218 = scmp.ne.s32.totalorder %s210, %s213
      %p219 = scmp.eq.s32.totalorder %s27, 0
      %p220 = por %p218, %p219
      %p221 = scmp.ne.s32.totalorder %s210, %s213
      %p222 = scmp.eq.s32.totalorder %s32, 1
      %p223 = por %p221, %p222
      %p224 = scmp.ne.s32.totalorder %s213, %s214
      %p225 = scmp.eq.s32.totalorder %s32, 0
      %p226 = por %p224, %p225
      %p227 = scmp.ne.s32.totalorder %s213, %s214
      %p228 = scmp.eq.s32.totalorder %s33, 1
      %p229 = por %p227, %p228
      %p231 = scmp.ne.s32.totalorder %s214, %s230
      %p232 = scmp.eq.s32.totalorder %s33, 0
      %p233 = por %p231, %p232
      %p234 = scmp.le.s32.totalorder 1, %s27
      %p235 = scmp.lt.s32.totalorder %s27, 3
      %p236 = pnand %p234, %p235
      %p237 = pneg %p236
      // Predicated region
      $region9: #{tpu_custom_call.1} parent=5 // pred_check
        _
      $region10: #{tpu_custom_call.1} parent=5 // pred_check_branch
        %239 = sbr.rel (%p236) target = $region12
      $region11: #{tpu_custom_call.1} parent=5 // pred_region
        %s240 = ssub.s32 %s27, 1
        // Predicated region
        $region13: #{tpu_custom_call.1} parent=11 // pred_check
          %p241 = pneg %p74
        $region14: #{tpu_custom_call.1} parent=11 // pred_check_branch
          %243 = sbr.rel (%p241) target = $region16
        $region15: #{tpu_custom_call.1} parent=11 // pred_region
          _
        $region16: #{tpu_custom_call.1} parent=11 // pred_fallthru
          _
        // Predicated region
        $region17: #{tpu_custom_call.1} parent=11 // pred_check
          %p244 = pneg %p95
        $region18: #{tpu_custom_call.1} parent=11 // pred_check_branch
          %246 = sbr.rel (%p244) target = $region20
        $region19: #{tpu_custom_call.1} parent=11 // pred_region
          _
        $region20: #{tpu_custom_call.1} parent=11 // pred_fallthru
          _
        // Predicated region
        $region21: #{tpu_custom_call.1} parent=11 // pred_check
          %p247 = pneg %p116
        $region22: #{tpu_custom_call.1} parent=11 // pred_check_branch
          %249 = sbr.rel (%p247) target = $region24
        $region23: #{tpu_custom_call.1} parent=11 // pred_region
          _
        $region24: #{tpu_custom_call.1} parent=11 // pred_fallthru
          _
        // Predicated region
        $region25: #{tpu_custom_call.1} parent=11 // pred_check
          %p250 = pneg %p137
        $region26: #{tpu_custom_call.1} parent=11 // pred_check_branch
          %252 = sbr.rel (%p250) target = $region28
        $region27: #{tpu_custom_call.1} parent=11 // pred_region
          _
        $region28: #{tpu_custom_call.1} parent=11 // pred_fallthru
          _
        // Predicated region
        $region29: #{tpu_custom_call.1} parent=11 // pred_check
          %p253 = pneg %p158
        $region30: #{tpu_custom_call.1} parent=11 // pred_check_branch
          %255 = sbr.rel (%p253) target = $region32
        $region31: #{tpu_custom_call.1} parent=11 // pred_region
          %s257 = ssub.s32 4096, 4096
          %258 = vsyncadd [#allocation7], %s257
          %s259 = sshll.u32 [#allocation6], 4
          %s260 = int_to_ptr.vmem [resolvable:$true] %s259
          %265 = dma.hbm_to_vmem [thread:$0]  %s7, 4096, %s260, [#allocation7], 64, 64, 4
        $region32: #{tpu_custom_call.1} parent=11 // pred_fallthru
          _
        // Predicated region
        $region33: #{tpu_custom_call.1} parent=11 // pred_check
          %p266 = pneg %p179
        $region34: #{tpu_custom_call.1} parent=11 // pred_check_branch
          %268 = sbr.rel (%p266) target = $region36
        $region35: #{tpu_custom_call.1} parent=11 // pred_region
          _
        $region36: #{tpu_custom_call.1} parent=11 // pred_fallthru
          _
        // Predicated region
        $region37: #{tpu_custom_call.1} parent=11 // pred_check
          %p269 = pneg %p200
        $region38: #{tpu_custom_call.1} parent=11 // pred_check_branch
          %271 = sbr.rel (%p269) target = $region40
        $region39: #{tpu_custom_call.1} parent=11 // pred_region
          %s273 = ssub.s32 16, 16
          %274 = vsyncadd [#allocation9], %s273
          %s276 = sshll.u32 %s9, 4
          %s277 = int_to_ptr.vmem [resolvable:$true] %s276
          %279 = dma.vmem_to_smem %s277, 16, [#allocation10], [#allocation9]
        $region40: #{tpu_custom_call.1} parent=11 // pred_fallthru
          _
      $region12: #{tpu_custom_call.1} parent=5 // pred_fallthru
        _
      %p280 = scmp.lt.s32.totalorder %s27, 2
      // Predicated region
      $region41: #{tpu_custom_call.1} parent=5 // pred_check
        %p281 = pneg %p280
      $region42: #{tpu_custom_call.1} parent=5 // pred_check_branch
        %283 = sbr.rel (%p281) target = $region44
      $region43: #{tpu_custom_call.1} parent=5 // pred_region
        // Predicated region
        $region45: #{tpu_custom_call.1} parent=43 // pred_check
          %p284 = pneg %p47
        $region46: #{tpu_custom_call.1} parent=43 // pred_check_branch
          %286 = sbr.rel (%p284) target = $region48
        $region47: #{tpu_custom_call.1} parent=43 // pred_region
          %p287 = scmp.lt.s32.totalorder %s27, 1
          %s288 = scalar_select %p287, %s27, 1
          %s289 = smul.addr %s288, 8
          %s290 = scalar_lea.vmem %s2, %s289
        $region48: #{tpu_custom_call.1} parent=43 // pred_fallthru
          _
      $region44: #{tpu_custom_call.1} parent=5 // pred_fallthru
        _
      %p291 = scmp.le.s32.totalorder 1, %s27
      %p292 = scmp.lt.s32.totalorder %s27, 3
      %p293 = pnand %p291, %p292
      %p294 = pneg %p293
      // Predicated region
      $region49: #{tpu_custom_call.1} parent=5 // pred_check
        _
      $region50: #{tpu_custom_call.1} parent=5 // pred_check_branch
        %296 = sbr.rel (%p293) target = $region52
      $region51: #{tpu_custom_call.1} parent=5 // pred_region
        %s297 = ssub.s32 %s27, 1
        // Predicated region
        $region53: #{tpu_custom_call.1} parent=51 // pred_check
          %p298 = pneg %p158
        $region54: #{tpu_custom_call.1} parent=51 // pred_check_branch
          %300 = sbr.rel (%p298) target = $region56
        $region55: #{tpu_custom_call.1} parent=51 // pred_region
          %301 = dma.done [#allocation7], 4096
        $region56: #{tpu_custom_call.1} parent=51 // pred_fallthru
          _
        // Predicated region
        $region57: #{tpu_custom_call.1} parent=51 // pred_check
          %p302 = pneg %p200
        $region58: #{tpu_custom_call.1} parent=51 // pred_check_branch
          %304 = sbr.rel (%p302) target = $region60
        $region59: #{tpu_custom_call.1} parent=51 // pred_region
          %305 = dma.done [#allocation9], 16
        $region60: #{tpu_custom_call.1} parent=51 // pred_fallthru
          _
        %306 = sfence
        %p307 = scmp.lt.s32.totalorder %s32, 1
        %s308 = scalar_select %p307, %s32, 1
        %s309 = smul.addr %s308, 8
        %s310 = scalar_lea.vmem %s2, %s309
        %p311 = pneg %p53
        %p312 = pneg %p50
        %p313 = pneg %p74
        %p314 = pneg %p71
        %p315 = pneg %p95
        %p316 = pneg %p92
        %p317 = pneg %p116
        %p318 = pneg %p113
        %p319 = pneg %p137
        %p320 = pneg %p134
        %p321 = pneg %p158
        %p322 = pneg %p155
        %p323 = pneg %p179
        %p324 = pneg %p176
        %p325 = pneg %p200
        %p326 = pneg %p197
        %p327 = pneg %p226
        %p328 = pneg %p223
        %s329 = sand.u32 %s213, 1
        %s330 = scalar_lea.sflag [#allocation8], %s329
        %s331 = sand.u32 %s213, 1
        %s332 = smul.addr %s331, 8
        %s333 = scalar_lea.vmem [#allocation11], %s332
        %p334 = scmp.lt.s32.totalorder %s32, 1
        %s335 = scalar_select %p334, %s32, 1
        %s336 = smul.addr %s335, 8
        %s337 = scalar_lea.vmem %s2, %s336
        %v339 = vld [vmem:[%s5] sm:$0x1]
        %v340 = vld [vmem:[%s6] sm:$0x1]
        %s341 = smul.u32 %s32, 8
        %s342 = sld [smem:[#allocation5 + %s341]]
        %s343 = smul.addr %s342, 16
        %s344 = scalar_lea.hbm %s1, %s343
        // Predicated region
        $region61: #{tpu_custom_call.1} parent=51 // pred_check
          _
        $region62: #{tpu_custom_call.1} parent=51 // pred_check_branch
          %346 = sbr.rel target = $region64
        $region63: #{tpu_custom_call.1} parent=51 // pred_region
          %347 = sst [smem:[#allocation14]] [#allocation13]
          %348 = sst [smem:[#allocation15]] [#allocation12]
        $region64: #{tpu_custom_call.1} parent=51 // pred_fallthru
          _
        %350 = shalt.err (0)
        %s352 = sshll.u32 [#allocation2], 4
        %s353 = int_to_ptr.vmem [resolvable:$true] %s352
        %355 = dma.hbm_to_vmem [thread:$0]  %s344, 16, %s353, [#allocation3]
        %s356 = sadd.s32 %s341, 1
        %s357 = sld [smem:[#allocation5 + %s356]]
        %s358 = smul.addr %s357, 16
        %s359 = scalar_lea.hbm %s1, %s358
        %s360 = scalar_lea.vmem [#allocation2], 1
        %s361 = scalar_lea.sflag [#allocation3], 1
        // Predicated region
        $region65: #{tpu_custom_call.1} parent=51 // pred_check
          _
        $region66: #{tpu_custom_call.1} parent=51 // pred_check_branch
          %363 = sbr.rel target = $region68
        $region67: #{tpu_custom_call.1} parent=51 // pred_region
          %364 = sst [smem:[#allocation14]] [#allocation17]
          %365 = sst [smem:[#allocation15]] [#allocation16]
        $region68: #{tpu_custom_call.1} parent=51 // pred_fallthru
          _
        %367 = shalt.err (0)
        %s369 = sshll.u32 %s360, 4
        %s370 = int_to_ptr.vmem [resolvable:$true] %s369
        %372 = dma.hbm_to_vmem [thread:$0]  %s359, 16, %s370, %s361
        %s373 = sadd.s32 %s341, 2
        %s374 = sld [smem:[#allocation5 + %s373]]
        %s375 = smul.addr %s374, 16
        %s376 = scalar_lea.hbm %s1, %s375
        %s377 = scalar_lea.vmem [#allocation2], 2
        %s378 = scalar_lea.sflag [#allocation3], 2
        // Predicated region
        $region69: #{tpu_custom_call.1} parent=51 // pred_check
          _
        $region70: #{tpu_custom_call.1} parent=51 // pred_check_branch
          %380 = sbr.rel target = $region72
        $region71: #{tpu_custom_call.1} parent=51 // pred_region
          %381 = sst [smem:[#allocation14]] [#allocation19]
          %382 = sst [smem:[#allocation15]] [#allocation18]
        $region72: #{tpu_custom_call.1} parent=51 // pred_fallthru
          _
        %384 = shalt.err (0)
        %s386 = sshll.u32 %s377, 4
        %s387 = int_to_ptr.vmem [resolvable:$true] %s386
        %389 = dma.hbm_to_vmem [thread:$0]  %s376, 16, %s387, %s378
        %s390 = sadd.s32 %s341, 3
        %s391 = sld [smem:[#allocation5 + %s390]]
        %s392 = smul.addr %s391, 16
        %s393 = scalar_lea.hbm %s1, %s392
        %s394 = scalar_lea.vmem [#allocation2], 3
        %s395 = scalar_lea.sflag [#allocation3], 3
        // Predicated region
        $region73: #{tpu_custom_call.1} parent=51 // pred_check
          _
        $region74: #{tpu_custom_call.1} parent=51 // pred_check_branch
          %397 = sbr.rel target = $region76
        $region75: #{tpu_custom_call.1} parent=51 // pred_region
          %398 = sst [smem:[#allocation14]] [#allocation21]
          %399 = sst [smem:[#allocation15]] [#allocation20]
        $region76: #{tpu_custom_call.1} parent=51 // pred_fallthru
          _
        %401 = shalt.err (0)
        %s403 = sshll.u32 %s394, 4
        %s404 = int_to_ptr.vmem [resolvable:$true] %s403
        %406 = dma.hbm_to_vmem [thread:$0]  %s393, 16, %s404, %s395
        %s407 = sadd.s32 %s341, 4
        %s408 = sld [smem:[#allocation5 + %s407]]
        %s409 = smul.addr %s408, 16
        %s410 = scalar_lea.hbm %s1, %s409
        %s411 = scalar_lea.vmem [#allocation2], 4
        %s412 = scalar_lea.sflag [#allocation3], 4
        // Predicated region
        $region77: #{tpu_custom_call.1} parent=51 // pred_check
          _
        $region78: #{tpu_custom_call.1} parent=51 // pred_check_branch
          %414 = sbr.rel target = $region80
        $region79: #{tpu_custom_call.1} parent=51 // pred_region
          %415 = sst [smem:[#allocation14]] [#allocation23]
          %416 = sst [smem:[#allocation15]] [#allocation22]
        $region80: #{tpu_custom_call.1} parent=51 // pred_fallthru
          _
        %418 = shalt.err (0)
        %s420 = sshll.u32 %s411, 4
        %s421 = int_to_ptr.vmem [resolvable:$true] %s420
        %423 = dma.hbm_to_vmem [thread:$0]  %s410, 16, %s421, %s412
        %s424 = sadd.s32 %s341, 5
        %s425 = sld [smem:[#allocation5 + %s424]]
        %s426 = smul.addr %s425, 16
        %s427 = scalar_lea.hbm %s1, %s426
        %s428 = scalar_lea.vmem [#allocation2], 5
        %s429 = scalar_lea.sflag [#allocation3], 5
        // Predicated region
        $region81: #{tpu_custom_call.1} parent=51 // pred_check
          _
        $region82: #{tpu_custom_call.1} parent=51 // pred_check_branch
          %431 = sbr.rel target = $region84
        $region83: #{tpu_custom_call.1} parent=51 // pred_region
          %432 = sst [smem:[#allocation14]] [#allocation25]
          %433 = sst [smem:[#allocation15]] [#allocation24]
        $region84: #{tpu_custom_call.1} parent=51 // pred_fallthru
          _
        %435 = shalt.err (0)
        %s437 = sshll.u32 %s428, 4
        %s438 = int_to_ptr.vmem [resolvable:$true] %s437
        %440 = dma.hbm_to_vmem [thread:$0]  %s427, 16, %s438, %s429
        %s441 = sadd.s32 %s341, 6
        %s442 = sld [smem:[#allocation5 + %s441]]
        %s443 = smul.addr %s442, 16
        %s444 = scalar_lea.hbm %s1, %s443
        %s445 = scalar_lea.vmem [#allocation2], 6
        %s446 = scalar_lea.sflag [#allocation3], 6
        // Predicated region
        $region85: #{tpu_custom_call.1} parent=51 // pred_check
          _
        $region86: #{tpu_custom_call.1} parent=51 // pred_check_branch
          %448 = sbr.rel target = $region88
        $region87: #{tpu_custom_call.1} parent=51 // pred_region
          %449 = sst [smem:[#allocation14]] [#allocation27]
          %450 = sst [smem:[#allocation15]] [#allocation26]
        $region88: #{tpu_custom_call.1} parent=51 // pred_fallthru
          _
        %452 = shalt.err (0)
        %s454 = sshll.u32 %s445, 4
        %s455 = int_to_ptr.vmem [resolvable:$true] %s454
        %457 = dma.hbm_to_vmem [thread:$0]  %s444, 16, %s455, %s446
        %s458 = sadd.s32 %s341, 7
        %s459 = sld [smem:[#allocation5 + %s458]]
        %s460 = smul.addr %s459, 16
        %s461 = scalar_lea.hbm %s1, %s460
        %s462 = scalar_lea.vmem [#allocation2], 7
        %s463 = scalar_lea.sflag [#allocation3], 7
        // Predicated region
        $region89: #{tpu_custom_call.1} parent=51 // pred_check
          _
        $region90: #{tpu_custom_call.1} parent=51 // pred_check_branch
          %465 = sbr.rel target = $region92
        $region91: #{tpu_custom_call.1} parent=51 // pred_region
          %466 = sst [smem:[#allocation14]] [#allocation29]
          %467 = sst [smem:[#allocation15]] [#allocation28]
        $region92: #{tpu_custom_call.1} parent=51 // pred_fallthru
          _
        %469 = shalt.err (0)
        %s471 = sshll.u32 %s462, 4
        %s472 = int_to_ptr.vmem [resolvable:$true] %s471
        %474 = dma.hbm_to_vmem [thread:$0]  %s461, 16, %s472, %s463
        %s475 = smul.u32 1, 1
        %s476 = sshll.u32 %s475, 4
        %477 = dma.done [#allocation3], %s476
        %s478 = sshll.u32 %s475, 4
        %479 = dma.done %s361, %s478
        %s480 = sshll.u32 %s475, 4
        %481 = dma.done %s378, %s480
        %s482 = sshll.u32 %s475, 4
        %483 = dma.done %s395, %s482
        %s484 = sshll.u32 %s475, 4
        %485 = dma.done %s412, %s484
        %s486 = sshll.u32 %s475, 4
        %487 = dma.done %s429, %s486
        %s488 = sshll.u32 %s475, 4
        %489 = dma.done %s446, %s488
        %s490 = sshll.u32 %s475, 4
        %491 = dma.done %s463, %s490
        %v492 = vld [vmem:[#allocation2] sm:$0xff]
        %v493 = vld [vmem:[%s3] sm:$0xff]
        %v494 = vadd.f32 %v492, %v493
        %v495 = vld [vmem:[%s337] sm:$0xff]
        %v496 = vld [vmem:[%s4] sm:$0x1]
        %498 = vset.pattern.permute.xlu0 0
        %499 = vperm.xlu0 %498, %v495
        %v500 = vpop.permute.xlu0 %499
        %v503 = vlaneseq
        %v504 = vshrl.u32 %v503, 7
        %v505 = vsub.s32 0, %v504
        %v506 = vrot.slane %v496, %v505
        %v508 = vmul.f32 %v500, %v506
        %v509 = vadd.f32 %v494, %v508
        %510 = vadd.xlane.f32.xlu0 %v509
        %v511 = vpop.xlane.xlu0 %510
        %v512 = vrcp.pop 128.0
        %v513 = vmul.f32 %v511, %v512
        %v514 = vsub.f32 %v509, %v513
        %v515 = vmul.f32 %v514, %v514
        %516 = vadd.xlane.f32.xlu0 %v515
        %v517 = vpop.xlane.xlu0 %516
        %v518 = vmul.f32 %v517, %v512
        %v519 = vadd.f32 %v518, 1e-12
        %v520 = vrsqrt.pop %v519
        %v521 = vmul.f32 %v514, %v520
        %v523 = vlaneseq
        %v524 = vshrl.u32 %v523, 7
        %v525 = vsub.s32 0, %v524
        %v526 = vrot.slane %v339, %v525
        %v528 = vmul.f32 %v521, %v526
        %v530 = vlaneseq
        %v531 = vshrl.u32 %v530, 7
        %v532 = vsub.s32 0, %v531
        %v533 = vrot.slane %v340, %v532
        %v535 = vadd.f32 %v528, %v533
        %s536 = sld [smem:[#allocation10]]
        %v537 = vstv %s536
        %v538 = vmul.f32 %v537, %v535
        %v539 = vpack.c.bf16 %v535, %v535
        %v540 = vld [vmem:[#allocation6] sm:$0xf]
        %v541 = vld [vmem:[#allocation6 + $0x4] sm:$0xf]
        %v542 = vld [vmem:[#allocation6 + $0x8] sm:$0xf]
        %v543 = vld [vmem:[#allocation6 + $0xc] sm:$0xf]
        %v544 = vld [vmem:[#allocation6 + $0x10] sm:$0xf]
        %v545 = vld [vmem:[#allocation6 + $0x14] sm:$0xf]
        %v546 = vld [vmem:[#allocation6 + $0x18] sm:$0xf]
        %v547 = vld [vmem:[#allocation6 + $0x1c] sm:$0xf]
        %v548 = vld [vmem:[#allocation6 + $0x20] sm:$0xf]
        %v549 = vld [vmem:[#allocation6 + $0x24] sm:$0xf]
        %v550 = vld [vmem:[#allocation6 + $0x28] sm:$0xf]
        %v551 = vld [vmem:[#allocation6 + $0x2c] sm:$0xf]
        %v552 = vld [vmem:[#allocation6 + $0x30] sm:$0xf]
        %v553 = vld [vmem:[#allocation6 + $0x34] sm:$0xf]
        %v554 = vld [vmem:[#allocation6 + $0x38] sm:$0xf]
        %v555 = vld [vmem:[#allocation6 + $0x3c] sm:$0xf]
        %v556 = vld [vmem:[%s8] sm:$0x1]
        %v558 = vlaneseq
        %v559 = vshrl.u32 %v558, 7
        %v560 = vsub.s32 0, %v559
        %v561 = vrot.slane %v556, %v560
        %v579 = vunpack.c.l.b16 %v540
        %v580 = vunpack.c.l.b16 %v541
        %v581 = vunpack.c.l.b16 %v542
        %v582 = vunpack.c.l.b16 %v543
        %v583 = vunpack.c.l.b16 %v544
        %v584 = vunpack.c.l.b16 %v545
        %v585 = vunpack.c.l.b16 %v546
        %v586 = vunpack.c.l.b16 %v547
        %v587 = vunpack.c.l.b16 %v548
        %v588 = vunpack.c.l.b16 %v549
        %v589 = vunpack.c.l.b16 %v550
        %v590 = vunpack.c.l.b16 %v551
        %v591 = vunpack.c.l.b16 %v552
        %v592 = vunpack.c.l.b16 %v553
        %v593 = vunpack.c.l.b16 %v554
        %v594 = vunpack.c.l.b16 %v555
        %v595 = vpack.c.b16 %v580, %v579
        %v596 = vpack.c.b16 %v582, %v581
        %v597 = vpack.c.b16 %v584, %v583
        %v598 = vpack.c.b16 %v586, %v585
        %v599 = vpack.c.b16 %v588, %v587
        %v600 = vpack.c.b16 %v590, %v589
        %v601 = vpack.c.b16 %v592, %v591
        %v602 = vpack.c.b16 %v594, %v593
        %611 = vmatprep.subr.bf16.mxu0 0
        %612 = vmatpush1.bf16.msra.mxu0 %v595
        %613 = vmatprep.subr.bf16.mxu0 0
        %614 = vmatpush1.bf16.msra.mxu0 %v596
        %615 = vmatprep.subr.bf16.mxu0 0
        %616 = vmatpush1.bf16.msra.mxu0 %v597
        %617 = vmatprep.subr.bf16.mxu0 0
        %618 = vmatpush1.bf16.msra.mxu0 %v598
        %619 = vmatprep.subr.bf16.mxu0 0
        %620 = vmatpush1.bf16.msra.mxu0 %v599
        %621 = vmatprep.subr.bf16.mxu0 0
        %622 = vmatpush1.bf16.msra.mxu0 %v600
        %623 = vmatprep.subr.bf16.mxu0 0
        %624 = vmatpush1.bf16.msra.mxu0 %v601
        %625 = vmatprep.subr.bf16.mxu0 0
        %626 = vmatpush1.bf16.msra.mxu0 %v602
        %627 = vmatprep.subr.bf16.mxu0 0
        %628 = vmatpush1.bf16.msra.mxu0 0
        %629 = vmatprep.subr.bf16.mxu0 0
        %630 = vmatpush1.bf16.msra.mxu0 0
        %631 = vmatprep.subr.bf16.mxu0 0
        %632 = vmatpush1.bf16.msra.mxu0 0
        %633 = vmatprep.subr.bf16.mxu0 0
        %634 = vmatpush1.bf16.msra.mxu0 0
        %635 = vmatprep.subr.bf16.mxu0 0
        %636 = vmatpush1.bf16.msra.mxu0 0
        %637 = vmatprep.subr.bf16.mxu0 0
        %638 = vmatpush1.bf16.msra.mxu0 0
        %639 = vmatprep.subr.bf16.mxu0 0
        %640 = vmatpush1.bf16.msra.mxu0 0
        %641 = vmatprep.subr.bf16.mxu0 0
        %642 = vmatpush1.bf16.msra.mxu0 0
        %643 = vmatprep.mubr.bf16.mxu0 0
        %644 = vmatmul.mubr.bf16.gmra.mrb[0].mxu0 %v539
        %v645 = vpop.f32.mrb[0].mxu0
        %v646 = vadd.f32 %v561, %v645
        %v647 = vpop.f32.mrb[0].mxu0
        %v648 = vpop.f32.mrb[0].mxu0
        %v649 = vpop.f32.mrb[0].mxu0
        %650 = vdwg.mxu0
        %v651 = vmul.f32 %v646, %v646
        %v652 = vmul.f32 %v646, %v651
        %v653 = vmul.f32 %v652, 0.044715
        %v654 = vadd.f32 %v646, %v653
        %v655 = vmul.f32 %v654, 0.7978846
        %v656 = vtanh.pop %v655
        %v657 = vadd.f32 %v656, 1.0
        %v658 = vmul.f32 %v657, 0.5
        %v659 = vmul.f32 %v646, %v658
        %s660 = sld [smem:[#allocation10 + $0x1]]
        %v661 = vstv %s660
        %v662 = vmul.f32 %v661, %v659
        %v663 = vadd.f32 %v538, %v662
        %v664 = vpack.c.bf16 %v659, %v659
        %s665 = scalar_lea.vmem [#allocation6], 64
        %v666 = vld [vmem:[%s665] sm:$0xf]
        %v667 = vld [vmem:[%s665 + $0x4] sm:$0xf]
        %v668 = vld [vmem:[%s665 + $0x8] sm:$0xf]
        %v669 = vld [vmem:[%s665 + $0xc] sm:$0xf]
        %v670 = vld [vmem:[%s665 + $0x10] sm:$0xf]
        %v671 = vld [vmem:[%s665 + $0x14] sm:$0xf]
        %v672 = vld [vmem:[%s665 + $0x18] sm:$0xf]
        %v673 = vld [vmem:[%s665 + $0x1c] sm:$0xf]
        %v674 = vld [vmem:[%s665 + $0x20] sm:$0xf]
        %v675 = vld [vmem:[%s665 + $0x24] sm:$0xf]
        %v676 = vld [vmem:[%s665 + $0x28] sm:$0xf]
        %v677 = vld [vmem:[%s665 + $0x2c] sm:$0xf]
        %v678 = vld [vmem:[%s665 + $0x30] sm:$0xf]
        %v679 = vld [vmem:[%s665 + $0x34] sm:$0xf]
        %v680 = vld [vmem:[%s665 + $0x38] sm:$0xf]
        %v681 = vld [vmem:[%s665 + $0x3c] sm:$0xf]
        %s682 = scalar_lea.vmem %s8, 1
        %v683 = vld [vmem:[%s682] sm:$0x1]
        %v685 = vlaneseq
        %v686 = vshrl.u32 %v685, 7
        %v687 = vsub.s32 0, %v686
        %v688 = vrot.slane %v683, %v687
        %v706 = vunpack.c.l.b16 %v666
        %v707 = vunpack.c.l.b16 %v667
        %v708 = vunpack.c.l.b16 %v668
        %v709 = vunpack.c.l.b16 %v669
        %v710 = vunpack.c.l.b16 %v670
        %v711 = vunpack.c.l.b16 %v671
        %v712 = vunpack.c.l.b16 %v672
        %v713 = vunpack.c.l.b16 %v673
        %v714 = vunpack.c.l.b16 %v674
        %v715 = vunpack.c.l.b16 %v675
        %v716 = vunpack.c.l.b16 %v676
        %v717 = vunpack.c.l.b16 %v677
        %v718 = vunpack.c.l.b16 %v678
        %v719 = vunpack.c.l.b16 %v679
        %v720 = vunpack.c.l.b16 %v680
        %v721 = vunpack.c.l.b16 %v681
        %v722 = vpack.c.b16 %v707, %v706
        %v723 = vpack.c.b16 %v709, %v708
        %v724 = vpack.c.b16 %v711, %v710
        %v725 = vpack.c.b16 %v713, %v712
        %v726 = vpack.c.b16 %v715, %v714
        %v727 = vpack.c.b16 %v717, %v716
        %v728 = vpack.c.b16 %v719, %v718
        %v729 = vpack.c.b16 %v721, %v720
        %738 = vmatprep.subr.bf16.mxu0 0
        %739 = vmatpush1.bf16.msra.mxu0 %v722
        %740 = vmatprep.subr.bf16.mxu0 0
        %741 = vmatpush1.bf16.msra.mxu0 %v723
        %742 = vmatprep.subr.bf16.mxu0 0
        %743 = vmatpush1.bf16.msra.mxu0 %v724
        %744 = vmatprep.subr.bf16.mxu0 0
        %745 = vmatpush1.bf16.msra.mxu0 %v725
        %746 = vmatprep.subr.bf16.mxu0 0
        %747 = vmatpush1.bf16.msra.mxu0 %v726
        %748 = vmatprep.subr.bf16.mxu0 0
        %749 = vmatpush1.bf16.msra.mxu0 %v727
        %750 = vmatprep.subr.bf16.mxu0 0
        %751 = vmatpush1.bf16.msra.mxu0 %v728
        %752 = vmatprep.subr.bf16.mxu0 0
        %753 = vmatpush1.bf16.msra.mxu0 %v729
        %754 = vmatprep.subr.bf16.mxu0 0
        %755 = vmatpush1.bf16.msra.mxu0 0
        %756 = vmatprep.subr.bf16.mxu0 0
        %757 = vmatpush1.bf16.msra.mxu0 0
        %758 = vmatprep.subr.bf16.mxu0 0
        %759 = vmatpush1.bf16.msra.mxu0 0
        %760 = vmatprep.subr.bf16.mxu0 0
        %761 = vmatpush1.bf16.msra.mxu0 0
        %762 = vmatprep.subr.bf16.mxu0 0
        %763 = vmatpush1.bf16.msra.mxu0 0
        %764 = vmatprep.subr.bf16.mxu0 0
        %765 = vmatpush1.bf16.msra.mxu0 0
        %766 = vmatprep.subr.bf16.mxu0 0
        %767 = vmatpush1.bf16.msra.mxu0 0
        %768 = vmatprep.subr.bf16.mxu0 0
        %769 = vmatpush1.bf16.msra.mxu0 0
        %770 = vmatprep.mubr.bf16.mxu0 0
        %771 = vmatmul.mubr.bf16.gmra.mrb[0].mxu0 %v664
        %v772 = vpop.f32.mrb[0].mxu0
        %v773 = vadd.f32 %v688, %v772
        %v774 = vpop.f32.mrb[0].mxu0
        %v775 = vpop.f32.mrb[0].mxu0
        %v776 = vpop.f32.mrb[0].mxu0
        %777 = vdwg.mxu0
        %v778 = vmul.f32 %v773, %v773
        %v779 = vmul.f32 %v773, %v778
        %v780 = vmul.f32 %v779, 0.044715
        %v781 = vadd.f32 %v773, %v780
        %v782 = vmul.f32 %v781, 0.7978846
        %v783 = vtanh.pop %v782
        %v784 = vadd.f32 %v783, 1.0
        %v785 = vmul.f32 %v784, 0.5
        %v786 = vmul.f32 %v773, %v785
        %s787 = sld [smem:[#allocation10 + $0x2]]
        %v788 = vstv %s787
        %v789 = vmul.f32 %v788, %v786
        %v790 = vadd.f32 %v663, %v789
        %v791 = vpack.c.bf16 %v786, %v786
        %s792 = scalar_lea.vmem [#allocation6], 128
        %v793 = vld [vmem:[%s792] sm:$0xf]
        %v794 = vld [vmem:[%s792 + $0x4] sm:$0xf]
        %v795 = vld [vmem:[%s792 + $0x8] sm:$0xf]
        %v796 = vld [vmem:[%s792 + $0xc] sm:$0xf]
        %v797 = vld [vmem:[%s792 + $0x10] sm:$0xf]
        %v798 = vld [vmem:[%s792 + $0x14] sm:$0xf]
        %v799 = vld [vmem:[%s792 + $0x18] sm:$0xf]
        %v800 = vld [vmem:[%s792 + $0x1c] sm:$0xf]
        %v801 = vld [vmem:[%s792 + $0x20] sm:$0xf]
        %v802 = vld [vmem:[%s792 + $0x24] sm:$0xf]
        %v803 = vld [vmem:[%s792 + $0x28] sm:$0xf]
        %v804 = vld [vmem:[%s792 + $0x2c] sm:$0xf]
        %v805 = vld [vmem:[%s792 + $0x30] sm:$0xf]
        %v806 = vld [vmem:[%s792 + $0x34] sm:$0xf]
        %v807 = vld [vmem:[%s792 + $0x38] sm:$0xf]
        %v808 = vld [vmem:[%s792 + $0x3c] sm:$0xf]
        %s809 = scalar_lea.vmem %s8, 2
        %v810 = vld [vmem:[%s809] sm:$0x1]
        %v812 = vlaneseq
        %v813 = vshrl.u32 %v812, 7
        %v814 = vsub.s32 0, %v813
        %v815 = vrot.slane %v810, %v814
        %v833 = vunpack.c.l.b16 %v793
        %v834 = vunpack.c.l.b16 %v794
        %v835 = vunpack.c.l.b16 %v795
        %v836 = vunpack.c.l.b16 %v796
        %v837 = vunpack.c.l.b16 %v797
        %v838 = vunpack.c.l.b16 %v798
        %v839 = vunpack.c.l.b16 %v799
        %v840 = vunpack.c.l.b16 %v800
        %v841 = vunpack.c.l.b16 %v801
        %v842 = vunpack.c.l.b16 %v802
        %v843 = vunpack.c.l.b16 %v803
        %v844 = vunpack.c.l.b16 %v804
        %v845 = vunpack.c.l.b16 %v805
        %v846 = vunpack.c.l.b16 %v806
        %v847 = vunpack.c.l.b16 %v807
        %v848 = vunpack.c.l.b16 %v808
        %v849 = vpack.c.b16 %v834, %v833
        %v850 = vpack.c.b16 %v836, %v835
        %v851 = vpack.c.b16 %v838, %v837
        %v852 = vpack.c.b16 %v840, %v839
        %v853 = vpack.c.b16 %v842, %v841
        %v854 = vpack.c.b16 %v844, %v843
        %v855 = vpack.c.b16 %v846, %v845
        %v856 = vpack.c.b16 %v848, %v847
        %865 = vmatprep.subr.bf16.mxu0 0
        %866 = vmatpush1.bf16.msra.mxu0 %v849
        %867 = vmatprep.subr.bf16.mxu0 0
        %868 = vmatpush1.bf16.msra.mxu0 %v850
        %869 = vmatprep.subr.bf16.mxu0 0
        %870 = vmatpush1.bf16.msra.mxu0 %v851
        %871 = vmatprep.subr.bf16.mxu0 0
        %872 = vmatpush1.bf16.msra.mxu0 %v852
        %873 = vmatprep.subr.bf16.mxu0 0
        %874 = vmatpush1.bf16.msra.mxu0 %v853
        %875 = vmatprep.subr.bf16.mxu0 0
        %876 = vmatpush1.bf16.msra.mxu0 %v854
        %877 = vmatprep.subr.bf16.mxu0 0
        %878 = vmatpush1.bf16.msra.mxu0 %v855
        %879 = vmatprep.subr.bf16.mxu0 0
        %880 = vmatpush1.bf16.msra.mxu0 %v856
        %881 = vmatprep.subr.bf16.mxu0 0
        %882 = vmatpush1.bf16.msra.mxu0 0
        %883 = vmatprep.subr.bf16.mxu0 0
        %884 = vmatpush1.bf16.msra.mxu0 0
        %885 = vmatprep.subr.bf16.mxu0 0
        %886 = vmatpush1.bf16.msra.mxu0 0
        %887 = vmatprep.subr.bf16.mxu0 0
        %888 = vmatpush1.bf16.msra.mxu0 0
        %889 = vmatprep.subr.bf16.mxu0 0
        %890 = vmatpush1.bf16.msra.mxu0 0
        %891 = vmatprep.subr.bf16.mxu0 0
        %892 = vmatpush1.bf16.msra.mxu0 0
        %893 = vmatprep.subr.bf16.mxu0 0
        %894 = vmatpush1.bf16.msra.mxu0 0
        %895 = vmatprep.subr.bf16.mxu0 0
        %896 = vmatpush1.bf16.msra.mxu0 0
        %897 = vmatprep.mubr.bf16.mxu0 0
        %898 = vmatmul.mubr.bf16.gmra.mrb[0].mxu0 %v791
        %v899 = vpop.f32.mrb[0].mxu0
        %v900 = vadd.f32 %v815, %v899
        %v901 = vpop.f32.mrb[0].mxu0
        %v902 = vpop.f32.mrb[0].mxu0
        %v903 = vpop.f32.mrb[0].mxu0
        %904 = vdwg.mxu0
        %v905 = vmul.f32 %v900, %v900
        %v906 = vmul.f32 %v900, %v905
        %v907 = vmul.f32 %v906, 0.044715
        %v908 = vadd.f32 %v900, %v907
        %v909 = vmul.f32 %v908, 0.7978846
        %v910 = vtanh.pop %v909
        %v911 = vadd.f32 %v910, 1.0
        %v912 = vmul.f32 %v911, 0.5
        %v913 = vmul.f32 %v900, %v912
        %s914 = sld [smem:[#allocation10 + $0x3]]
        %v915 = vstv %s914
        %v916 = vmul.f32 %v915, %v913
        %v917 = vadd.f32 %v790, %v916
        %v918 = vpack.c.bf16 %v913, %v913
        %s919 = scalar_lea.vmem [#allocation6], 192
        %v920 = vld [vmem:[%s919] sm:$0xf]
        %v921 = vld [vmem:[%s919 + $0x4] sm:$0xf]
        %v922 = vld [vmem:[%s919 + $0x8] sm:$0xf]
        %v923 = vld [vmem:[%s919 + $0xc] sm:$0xf]
        %v924 = vld [vmem:[%s919 + $0x10] sm:$0xf]
        %v925 = vld [vmem:[%s919 + $0x14] sm:$0xf]
        %v926 = vld [vmem:[%s919 + $0x18] sm:$0xf]
        %v927 = vld [vmem:[%s919 + $0x1c] sm:$0xf]
        %v928 = vld [vmem:[%s919 + $0x20] sm:$0xf]
        %v929 = vld [vmem:[%s919 + $0x24] sm:$0xf]
        %v930 = vld [vmem:[%s919 + $0x28] sm:$0xf]
        %v931 = vld [vmem:[%s919 + $0x2c] sm:$0xf]
        %v932 = vld [vmem:[%s919 + $0x30] sm:$0xf]
        %v933 = vld [vmem:[%s919 + $0x34] sm:$0xf]
        %v934 = vld [vmem:[%s919 + $0x38] sm:$0xf]
        %v935 = vld [vmem:[%s919 + $0x3c] sm:$0xf]
        %s936 = scalar_lea.vmem %s8, 3
        %v937 = vld [vmem:[%s936] sm:$0x1]
        %v939 = vlaneseq
        %v940 = vshrl.u32 %v939, 7
        %v941 = vsub.s32 0, %v940
        %v942 = vrot.slane %v937, %v941
        %v960 = vunpack.c.l.b16 %v920
        %v961 = vunpack.c.l.b16 %v921
        %v962 = vunpack.c.l.b16 %v922
        %v963 = vunpack.c.l.b16 %v923
        %v964 = vunpack.c.l.b16 %v924
        %v965 = vunpack.c.l.b16 %v925
        %v966 = vunpack.c.l.b16 %v926
        %v967 = vunpack.c.l.b16 %v927
        %v968 = vunpack.c.l.b16 %v928
        %v969 = vunpack.c.l.b16 %v929
        %v970 = vunpack.c.l.b16 %v930
        %v971 = vunpack.c.l.b16 %v931
        %v972 = vunpack.c.l.b16 %v932
        %v973 = vunpack.c.l.b16 %v933
        %v974 = vunpack.c.l.b16 %v934
        %v975 = vunpack.c.l.b16 %v935
        %v976 = vpack.c.b16 %v961, %v960
        %v977 = vpack.c.b16 %v963, %v962
        %v978 = vpack.c.b16 %v965, %v964
        %v979 = vpack.c.b16 %v967, %v966
        %v980 = vpack.c.b16 %v969, %v968
        %v981 = vpack.c.b16 %v971, %v970
        %v982 = vpack.c.b16 %v973, %v972
        %v983 = vpack.c.b16 %v975, %v974
        %992 = vmatprep.subr.bf16.mxu0 0
        %993 = vmatpush1.bf16.msra.mxu0 %v976
        %994 = vmatprep.subr.bf16.mxu0 0
        %995 = vmatpush1.bf16.msra.mxu0 %v977
        %996 = vmatprep.subr.bf16.mxu0 0
        %997 = vmatpush1.bf16.msra.mxu0 %v978
        %998 = vmatprep.subr.bf16.mxu0 0
        %999 = vmatpush1.bf16.msra.mxu0 %v979
        %1000 = vmatprep.subr.bf16.mxu0 0
        %1001 = vmatpush1.bf16.msra.mxu0 %v980
        %1002 = vmatprep.subr.bf16.mxu0 0
        %1003 = vmatpush1.bf16.msra.mxu0 %v981
        %1004 = vmatprep.subr.bf16.mxu0 0
        %1005 = vmatpush1.bf16.msra.mxu0 %v982
        %1006 = vmatprep.subr.bf16.mxu0 0
        %1007 = vmatpush1.bf16.msra.mxu0 %v983
        %1008 = vmatprep.subr.bf16.mxu0 0
        %1009 = vmatpush1.bf16.msra.mxu0 0
        %1010 = vmatprep.subr.bf16.mxu0 0
        %1011 = vmatpush1.bf16.msra.mxu0 0
        %1012 = vmatprep.subr.bf16.mxu0 0
        %1013 = vmatpush1.bf16.msra.mxu0 0
        %1014 = vmatprep.subr.bf16.mxu0 0
        %1015 = vmatpush1.bf16.msra.mxu0 0
        %1016 = vmatprep.subr.bf16.mxu0 0
        %1017 = vmatpush1.bf16.msra.mxu0 0
        %1018 = vmatprep.subr.bf16.mxu0 0
        %1019 = vmatpush1.bf16.msra.mxu0 0
        %1020 = vmatprep.subr.bf16.mxu0 0
        %1021 = vmatpush1.bf16.msra.mxu0 0
        %1022 = vmatprep.subr.bf16.mxu0 0
        %1023 = vmatpush1.bf16.msra.mxu0 0
        %1024 = vmatprep.mubr.bf16.mxu0 0
        %1025 = vmatmul.mubr.bf16.gmra.mrb[0].mxu0 %v918
        %v1026 = vpop.f32.mrb[0].mxu0
        %v1027 = vadd.f32 %v942, %v1026
        %v1028 = vpop.f32.mrb[0].mxu0
        %v1029 = vpop.f32.mrb[0].mxu0
        %v1030 = vpop.f32.mrb[0].mxu0
        %1031 = vdwg.mxu0
        %v1032 = vmul.f32 %v1027, %v1027
        %v1033 = vmul.f32 %v1027, %v1032
        %v1034 = vmul.f32 %v1033, 0.044715
        %v1035 = vadd.f32 %v1027, %v1034
        %v1036 = vmul.f32 %v1035, 0.7978846
        %v1037 = vtanh.pop %v1036
        %v1038 = vadd.f32 %v1037, 1.0
        %v1039 = vmul.f32 %v1038, 0.5
        %v1040 = vmul.f32 %v1027, %v1039
        %s1041 = sld [smem:[#allocation10 + $0x4]]
        %v1042 = vstv %s1041
        %v1043 = vmul.f32 %v1042, %v1040
        %v1044 = vadd.f32 %v917, %v1043
        %1045 = vst [vmem:[%s333] sm:$0xff] %v1044
        %s1046 = sand.u32 %s213, 1
        %s1047 = scalar_lea.sflag [#allocation8], %s1046
        %s1048 = sand.u32 %s213, 1
        %s1049 = smul.addr %s1048, 8
        %s1050 = scalar_lea.vmem [#allocation11], %s1049
        // Predicated region
        $region93: #{tpu_custom_call.1} parent=51 // pred_check
          %p1051 = pneg %p223
        $region94: #{tpu_custom_call.1} parent=51 // pred_check_branch
          %1053 = sbr.rel (%p1051) target = $region96
        $region95: #{tpu_custom_call.1} parent=51 // pred_region
          %s1055 = ssub.s32 128, 128
          %1056 = vsyncadd %s1047, %s1055
          %s1057 = smul.addr %s32, 128
          %s1058 = scalar_lea.hbm %s10, %s1057
          %s1060 = sshll.u32 %s1050, 4
          %s1061 = int_to_ptr.vmem [resolvable:$true] %s1060
          %1063 = dma.vmem_to_hbm [thread:$0]  %s1061, 128, %s1058, %s1047
        $region96: #{tpu_custom_call.1} parent=51 // pred_fallthru
          _
      $region52: #{tpu_custom_call.1} parent=5 // pred_fallthru
        _
      %p1064 = scmp.le.s32.totalorder 2, %s27
      // Predicated region
      $region97: #{tpu_custom_call.1} parent=5 // pred_check
        %p1065 = pneg %p1064
      $region98: #{tpu_custom_call.1} parent=5 // pred_check_branch
        %1067 = sbr.rel (%p1065) target = $region100
      $region99: #{tpu_custom_call.1} parent=5 // pred_region
        %s1068 = ssub.s32 %s27, 2
        // Predicated region
        $region101: #{tpu_custom_call.1} parent=99 // pred_check
          %p1069 = pneg %p229
        $region102: #{tpu_custom_call.1} parent=99 // pred_check_branch
          %1071 = sbr.rel (%p1069) target = $region104
        $region103: #{tpu_custom_call.1} parent=99 // pred_region
          %s1072 = sand.u32 %s214, 1
          %s1073 = scalar_lea.sflag [#allocation8], %s1072
          %s1074 = sand.u32 %s214, 1
          %s1075 = smul.addr %s1074, 8
          %s1076 = scalar_lea.vmem [#allocation11], %s1075
          %1077 = dma.done %s1073, 128
        $region104: #{tpu_custom_call.1} parent=99 // pred_fallthru
          _
      $region100: #{tpu_custom_call.1} parent=5 // pred_fallthru
        _
    $region6: #{tpu_custom_call.1} parent=1 // loop_footer
      %s31 = sadd.s32 1, %s27
    $region7: #{tpu_custom_call.1} parent=1 // loop_footer_branch
      %26 = sbr.rel target = $region3
    $region8: #{tpu_custom_call.1} parent=1 // loop_exit
      _
    %1078 = vsyncpa [#allocation7], 1
    %s1079 = scalar_lea.sflag [#allocation7], 1
    %1080 = vsyncpa %s1079, 1
    %1081 = vsyncpa [#allocation8], 1
    %s1082 = scalar_lea.sflag [#allocation8], 1
    %1083 = vsyncpa %s1082, 1
    %1084 = vsyncpa [#allocation9], 1
    %s1085 = scalar_lea.sflag [#allocation9], 1
    %1086 = vsyncpa %s1085, 1
  %1087 = vsyncmov [#allocation3]
  %s1088 = vpop.sfrf %1087
  %p1089 = scmp.eq.s32.totalorder %s1088, 0
  %p1090 = pneg %p1089
  %1092 = shalt.err (%p1090)
  %s1093 = scalar_lea.sflag [#allocation3], 1
  %1094 = vsyncmov %s1093
  %s1095 = vpop.sfrf %1094
  %p1096 = scmp.eq.s32.totalorder %s1095, 0
  %p1097 = pneg %p1096
  %1099 = shalt.err (%p1097)
  %s1100 = scalar_lea.sflag [#allocation3], 2
  %1101 = vsyncmov %s1100
  %s1102 = vpop.sfrf %1101
  %p1103 = scmp.eq.s32.totalorder %s1102, 0
  %p1104 = pneg %p1103
  %1106 = shalt.err (%p1104)
  %s1107 = scalar_lea.sflag [#allocation3], 3
  %1108 = vsyncmov %s1107
  %s1109 = vpop.sfrf %1108
  %p1110 = scmp.eq.s32.totalorder %s1109, 0
  %p1111 = pneg %p1110
  %1113 = shalt.err (%p1111)
  %s1114 = scalar_lea.sflag [#allocation3], 4
  %1115 = vsyncmov %s1114
  %s1116 = vpop.sfrf %1115
  %p1117 = scmp.eq.s32.totalorder %s1116, 0
  %p1118 = pneg %p1117
  %1120 = shalt.err (%p1118)
  %s1121 = scalar_lea.sflag [#allocation3], 5
  %1122 = vsyncmov %s1121
  %s1123 = vpop.sfrf %1122
  %p1124 = scmp.eq.s32.totalorder %s1123, 0
  %p1125 = pneg %p1124
  %1127 = shalt.err (%p1125)
  %s1128 = scalar_lea.sflag [#allocation3], 6
  %1129 = vsyncmov %s1128
  %s1130 = vpop.sfrf %1129
  %p1131 = scmp.eq.s32.totalorder %s1130, 0
  %p1132 = pneg %p1131
  %1134 = shalt.err (%p1132)
  %s1135 = scalar_lea.sflag [#allocation3], 7
  %1136 = vsyncmov %s1135
  %s1137 = vpop.sfrf %1136
  %p1138 = scmp.eq.s32.totalorder %s1137, 0
  %p1139 = pneg %p1138
  %1141 = shalt.err (%p1139)

</llo_original>
